<compile_context>
chip_gen: v5e
topology: v5e:2x2
jax: 0.10.0
libtpu: 0.0.40
codegen_flags: <defaults>
</compile_context>

<pallas_src>
import jax
import jax.numpy as jnp
from jax.experimental import pallas as pl
from jax.experimental.pallas import tpu as pltpu


def _round_up(x, m):
    return ((x + m - 1) // m) * m


def rel_edge_kernel(src2_ref, dst2_ref, p_ref, out_ref):
    # src2_ref / dst2_ref: (TH, 2) int32 -- columns are (even edge, odd edge);
    #                      dst ids are pre-offset by N into the P_dst half.
    # p_ref:   (2N, Fe) f32 node projection table [h@W_src ; h@W_dst + b],
    #          VMEM-resident (constant index_map).
    # out_ref: (TH, 2*Fe) -- each row packs two consecutive edges lane-dense.
    p = p_ref[...]                                   # (2N, Fe) f32
    two_n = p.shape[0]
    th = out_ref.shape[0]
    iota = jax.lax.broadcasted_iota(jnp.int32, (th, two_n), 1)

    def half(col):
        s = src2_ref[:, col:col + 1]                 # (TH, 1) int32
        d = dst2_ref[:, col:col + 1]                 # (TH, 1) int32 (already +N)
        # One-hot rows select exactly two table rows; the MXU dot performs the
        # gather + sum (P_src[s] + P_dst[d] + b) in one shot, f32 accumulate.
        onehot = ((iota == s).astype(jnp.float32) +
                  (iota == d).astype(jnp.float32))   # (TH, 2N) f32
        z = jnp.dot(onehot, p, preferred_element_type=jnp.float32)  # (TH, Fe)
        # activation = ReLU; dropout(p=0.0) is identity.
        # TODO(synk): training-mode dropout (p>0) would use pltpu.prng_seed +
        #             pltpu.stateful_bernoulli; omitted since module default p=0.0.
        return jnp.maximum(z, 0.0)

    out = jnp.concatenate([half(0), half(1)], axis=-1)   # (TH, 2*Fe), full 128 lanes
    out_ref[...] = out.astype(out_ref.dtype)


def rel_edge_layer(h, src_ids, dst_ids, W, b, *, tile_e=None,
                   out_dtype=jnp.float32):
    """Per-edge features: ReLU(concat(h[src], h[dst]) @ W + b)."""
    N, node_feat = h.shape
    edge_feat = W.shape[-1]
    E = src_ids.shape[0]

    # --- node-level projection precompute (one tiny (N,2F)x(2F,Fe) matmul) ---
    P_src = jnp.dot(h, W[:node_feat], precision=jax.lax.Precision.HIGHEST)
    P_dst = jnp.dot(h, W[node_feat:], precision=jax.lax.Precision.HIGHEST) + b
    P = jnp.concatenate([P_src, P_dst], axis=0).astype(jnp.float32)  # (2N, Fe)

    # --- tile size: big enough to amortize grid-step overhead, but keep
    #     n_tiles >= 2 so v7x's two TensorCores both get work. ---
    if tile_e is None:
        tile_e = min(4096, max(512, _round_up(pl.cdiv(E, 2), 512)))
    assert tile_e % 16 == 0
    n_tiles = pl.cdiv(E, tile_e)
    E_pad = n_tiles * tile_e

    # --- pad only the 4 B/edge id streams (never an [E, 2F] matrix) ---
    src = src_ids.astype(jnp.int32)
    dst = dst_ids.astype(jnp.int32) + N          # offset into the P_dst half
    if E_pad != E:
        src = jnp.pad(src, (0, E_pad - E))                       # node 0
        dst = jnp.pad(dst, (0, E_pad - E), constant_values=N)    # node 0 (+N)
    # Pair consecutive edges: row i holds edges (2i, 2i+1) -> lane-dense output.
    src2 = src.reshape(E_pad // 2, 2)
    dst2 = dst.reshape(E_pad // 2, 2)

    th = tile_e // 2
    out2 = pl.pallas_call(
        rel_edge_kernel,
        out_shape=jax.ShapeDtypeStruct((E_pad // 2, 2 * edge_feat), out_dtype),
        grid_spec=pltpu.PrefetchScalarGridSpec(
            num_scalar_prefetch=0,
            grid=(n_tiles,),
            in_specs=[
                pl.BlockSpec((th, 2), lambda i: (i, 0)),
                pl.BlockSpec((th, 2), lambda i: (i, 0)),
                pl.BlockSpec((2 * N, edge_feat), lambda i: (0, 0)),  # resident
            ],
            out_specs=pl.BlockSpec((th, 2 * edge_feat), lambda i: (i, 0)),
        ),
        compiler_params=pltpu.CompilerParams(
            dimension_semantics=("parallel",)),
    )(src2, dst2, P)

    # (E_pad//2, 2*Fe) row-major == (E_pad, Fe): free view reshape.
    # The [:E] slice fuses with downstream consumers under jit.
    return out2.reshape(E_pad, edge_feat)[:E]


if __name__ == "__main__":
    key = jax.random.PRNGKey(0)
    k_h, k_src, k_dst, k_w, k_b = jax.random.split(key, 5)

    N = 64            # number of nodes
    E = 1000          # number of edges (not a multiple of tile_e -> tests padding)
    node_feat = 32
    edge_feat = 64

    # Node features (graph ndata 'h' == inputs).
    h = jax.random.normal(k_h, (N, node_feat), dtype=jnp.float32)

    # Edge endpoint indices (synthetic graph).
    src_ids = jax.random.randint(k_src, (E,), 0, N, dtype=jnp.int32)
    dst_ids = jax.random.randint(k_dst, (E,), 0, N, dtype=jnp.int32)

    # nn.Linear(node_feat * 2, edge_feat): uniform init like torch.
    bound = 1.0 / jnp.sqrt(jnp.float32(2 * node_feat))
    W = jax.random.uniform(k_w, (2 * node_feat, edge_feat),
                           minval=-bound, maxval=bound, dtype=jnp.float32)
    b = jax.random.uniform(k_b, (edge_feat,),
                           minval=-bound, maxval=bound, dtype=jnp.float32)

    out = rel_edge_layer(h, src_ids, dst_ids, W, b)
    out = jax.block_until_ready(out)

    # Pure-f32 reference (same semantics as the PyTorch nn.Linear + ReLU path).
    cat_f32 = jnp.concatenate([h[src_ids], h[dst_ids]], axis=-1)
    ref = jnp.maximum(
        jnp.dot(cat_f32, W, precision=jax.lax.Precision.HIGHEST) + b, 0.0)

    assert out.shape == (E, edge_feat)
    # Kernel path differs from the reference only by f32 accumulation order and
    # the in-kernel (default-precision) one-hot gather dot -> tight tolerance.
    assert jnp.allclose(out, ref, atol=1e-2, rtol=1e-2), (
        float(jnp.max(jnp.abs(out - ref))))

    print("KERNEL_OK")
</pallas_src>

<mosaic_0001>
module attributes {stable_mosaic.version = 11 : i64} {
  func.func @rel_edge_kernel(%arg0: i32, %arg1: memref<256x2xi32, #tpu.memory_space<vmem>>, %arg2: memref<256x2xi32, #tpu.memory_space<vmem>>, %arg3: memref<128x64xf32, #tpu.memory_space<vmem>>, %arg4: memref<256x128xf32, #tpu.memory_space<vmem>>) attributes {dimension_semantics = [#tpu.dimension_semantics<parallel>], iteration_bounds = array<i64: 2>, scalar_prefetch = 0 : i64, scratch_operands = 0 : i64, tpu.core_type = #tpu.core_type<tc>, window_params = [{transform_indices = @transform_0, window_bounds = array<i64: 256, 2>}, {transform_indices = @transform_1, window_bounds = array<i64: 256, 2>}, {pipeline_mode = #tpu.pipeline_mode<synchronous>, transform_indices = @transform_2, window_bounds = array<i64: 128, 64>}, {transform_indices = @transform_3, window_bounds = array<i64: 256, 128>}]} {
    %c0 = arith.constant 0 : index
    %c0_0 = arith.constant 0 : index
    %0 = vector.load %arg3[%c0, %c0_0] : memref<128x64xf32, #tpu.memory_space<vmem>>, vector<128x64xf32>
    %1 = tpu.iota {dimensions = array<i32: 1>} : vector<256x128xi32>
    %c0_1 = arith.constant 0 : index
    %c0_2 = arith.constant 0 : index
    %2 = vector.load %arg1[%c0_1, %c0_2] : memref<256x2xi32, #tpu.memory_space<vmem>>, vector<256x1xi32>
    %c0_3 = arith.constant 0 : index
    %c0_4 = arith.constant 0 : index
    %3 = vector.load %arg2[%c0_3, %c0_4] : memref<256x2xi32, #tpu.memory_space<vmem>>, vector<256x1xi32>
    %4 = vector.broadcast %2 : vector<256x1xi32> to vector<256x128xi32>
    %5 = arith.cmpi eq, %1, %4 : vector<256x128xi32>
    %6 = arith.extui %5 : vector<256x128xi1> to vector<256x128xi32>
    %7 = arith.sitofp %6 : vector<256x128xi32> to vector<256x128xf32>
    %8 = vector.broadcast %3 : vector<256x1xi32> to vector<256x128xi32>
    %9 = arith.cmpi eq, %1, %8 : vector<256x128xi32>
    %10 = arith.extui %9 : vector<256x128xi1> to vector<256x128xi32>
    %11 = arith.sitofp %10 : vector<256x128xi32> to vector<256x128xf32>
    %12 = arith.addf %7, %11 : vector<256x128xf32>
    %cst = arith.constant dense<0.000000e+00> : vector<256x64xf32>
    %13 = tpu.matmul %12, %0, %cst {dimension_numbers = #tpu.dot_dimension_numbers<[1], [0], [0], [1], [0, 0, 1, 1], [], []>} : vector<256x128xf32>, vector<128x64xf32>, vector<256x64xf32> -> vector<256x64xf32>
    %cst_5 = arith.constant 0.000000e+00 : f32
    %14 = vector.broadcast %cst_5 : f32 to vector<256x64xf32>
    %15 = arith.maximumf %13, %14 : vector<256x64xf32>
    %c0_6 = arith.constant 0 : index
    %c1 = arith.constant 1 : index
    %16 = vector.load %arg1[%c0_6, %c1] : memref<256x2xi32, #tpu.memory_space<vmem>>, vector<256x1xi32>
    %c0_7 = arith.constant 0 : index
    %c1_8 = arith.constant 1 : index
    %17 = vector.load %arg2[%c0_7, %c1_8] : memref<256x2xi32, #tpu.memory_space<vmem>>, vector<256x1xi32>
    %18 = vector.broadcast %16 : vector<256x1xi32> to vector<256x128xi32>
    %19 = arith.cmpi eq, %1, %18 : vector<256x128xi32>
    %20 = arith.extui %19 : vector<256x128xi1> to vector<256x128xi32>
    %21 = arith.sitofp %20 : vector<256x128xi32> to vector<256x128xf32>
    %22 = vector.broadcast %17 : vector<256x1xi32> to vector<256x128xi32>
    %23 = arith.cmpi eq, %1, %22 : vector<256x128xi32>
    %24 = arith.extui %23 : vector<256x128xi1> to vector<256x128xi32>
    %25 = arith.sitofp %24 : vector<256x128xi32> to vector<256x128xf32>
    %26 = arith.addf %21, %25 : vector<256x128xf32>
    %cst_9 = arith.constant dense<0.000000e+00> : vector<256x64xf32>
    %27 = tpu.matmul %26, %0, %cst_9 {dimension_numbers = #tpu.dot_dimension_numbers<[1], [0], [0], [1], [0, 0, 1, 1], [], []>} : vector<256x128xf32>, vector<128x64xf32>, vector<256x64xf32> -> vector<256x64xf32>
    %cst_10 = arith.constant 0.000000e+00 : f32
    %28 = vector.broadcast %cst_10 : f32 to vector<256x64xf32>
    %29 = arith.maximumf %27, %28 : vector<256x64xf32>
    %30 = tpu.concatenate %15, %29 in 1 : vector<256x64xf32>, vector<256x64xf32> -> vector<256x128xf32>
    %c0_11 = arith.constant 0 : index
    %c0_12 = arith.constant 0 : index
    %31 = vector.load %arg4[%c0_11, %c0_12] : memref<256x128xf32, #tpu.memory_space<vmem>>, vector<256x128xf32>
    tpu.vector_store %arg4[%c0_11, %c0_12], %30 {strides = array<i32>} : memref<256x128xf32, #tpu.memory_space<vmem>>, vector<256x128xf32>,
    return
  }
  func.func @transform_0(%arg0: i32) -> (i32, i32) {
    %c0_i32 = arith.constant 0 : i32
    %c0_i32_0 = arith.constant 0 : i32
    return %arg0, %c0_i32 : i32, i32
  }
  func.func @transform_1(%arg0: i32) -> (i32, i32) {
    %c0_i32 = arith.constant 0 : i32
    %c0_i32_0 = arith.constant 0 : i32
    return %arg0, %c0_i32 : i32, i32
  }
  func.func @transform_2(%arg0: i32) -> (i32, i32) {
    %c0_i32 = arith.constant 0 : i32
    %c0_i32_0 = arith.constant 0 : i32
    %c0_i32_1 = arith.constant 0 : i32
    return %c0_i32, %c0_i32_0 : i32, i32
  }
  func.func @transform_3(%arg0: i32) -> (i32, i32) {
    %c0_i32 = arith.constant 0 : i32
    %c0_i32_0 = arith.constant 0 : i32
    return %arg0, %c0_i32 : i32, i32
  }
}

</mosaic_0001>

<llo_original>
// kernel: tpu_custom_call.1
$region0: #{tpu_custom_call.1}
  #allocation0 [shape = 'u32[]', space=smem, size = 0x4, offset = 0x4, fixed_abs, tag = 'smem constant byte address 0x4 - core index']
  #allocation1 [shape = 'u32[72,128]{1,0:T(1,128)}', space=vmem, size = 0x9000, scoped, tag = 'internal scratch']
  %s0 = inlined_call_operand.vmem [shape: s32[512,2], index: 0, kind: input, shape index: {}]
  %s1 = inlined_call_operand.vmem [shape: s32[512,2], index: 1, kind: input, shape index: {}]
  %s2 = inlined_call_operand.vmem [shape: f32[128,64], index: 2, kind: input, shape index: {}]
  %s3 = inlined_call_operand.hbm [shape: f32[512,128], index: 3, kind: output, shape index: {}]
  %s4 = sld [smem:[#allocation0]]
  $region45: #{tpu_custom_call.1} parent=0
    _
  %s6 = ssub.s32 1, %s4
  %s7 = scalar_select 0, %s6, %s4
  $region1: #{tpu_custom_call.1} parent=0
    #allocation2 [shape = 'u8[262144]{0}', space=vmem, size = 0x40000, scoped, tag = 'output window, operand 0']
    #allocation3 [shape = 's32[2]{0}', space=sflag, size = 0x8, scoped, tag = 'scoped memory for tpu_custom_call.1']
    %8 = vsyncpa [#allocation3], 0
    %s9 = scalar_lea.sflag [#allocation3], 1
    %10 = vsyncpa %s9, 0
    loop: start=0, step=1, limit=4
    $region2: #{tpu_custom_call.1} parent=1 // loop_pre_header
      _
    $region3: #{tpu_custom_call.1} parent=1 // loop_header
      %s12 = sphi 0, %s16
      %p13 = scmp.ge.s32.totalorder %s12, 4
      %s22 = sphi 0, %s24
      %s25 = sphi 0, %s22
      %s26 = sphi 0, %s25
      %s42 = sphi 0, %s26
      %s48 = sphi 0, %s50
      %s51 = sphi 0, %s48
      %s52 = sphi 0, %s51
      %s68 = sphi 0, %s52
      %s72 = sphi 0, %s72
      %s74 = sphi 0, %s72
      %s75 = sphi 0, %s74
      %s89 = sphi 0, %s75
      %s95 = sphi 0, %s97
      %s98 = sphi 0, %s95
      %s99 = sphi 0, %s98
      %s115 = sphi 0, %s99
    $region4: #{tpu_custom_call.1} parent=1 // loop_header_branch
      %15 = sbr.rel (%p13) target = $region8
    $region5: #{tpu_custom_call.1} parent=1 // loop_body
      %s17 = ssub.s32 %s12, 1
      %s18 = ssub.s32 %s12, 2
      %s19 = sadd.s32 %s12, 1
      %s20 = ssub.s32 %s12, %s19
      %p21 = scmp.eq.s32.totalorder %s20, 0
      %s23 = sadd.s32 %s22, 1
      %s24 = scalar_select %p21, %s22, %s23
      %p27 = pneg %p21
      %p28 = scmp.eq.s32.totalorder %s12, 1
      %p29 = por %p27, %p28
      %p30 = scmp.ne.s32.totalorder %s22, %s25
      %p31 = scmp.eq.s32.totalorder %s12, 0
      %p32 = por %p30, %p31
      %p33 = scmp.ne.s32.totalorder %s22, %s25
      %p34 = scmp.eq.s32.totalorder %s17, 1
      %p35 = por %p33, %p34
      %p36 = scmp.ne.s32.totalorder %s25, %s26
      %p37 = scmp.eq.s32.totalorder %s17, 0
      %p38 = por %p36, %p37
      %p39 = scmp.ne.s32.totalorder %s25, %s26
      %p40 = scmp.eq.s32.totalorder %s18, 1
      %p41 = por %p39, %p40
      %p43 = scmp.ne.s32.totalorder %s26, %s42
      %p44 = scmp.eq.s32.totalorder %s18, 0
      %p45 = por %p43, %p44
      %s46 = ssub.s32 %s12, %s19
      %p47 = scmp.eq.s32.totalorder %s46, 0
      %s49 = sadd.s32 %s48, 1
      %s50 = scalar_select %p47, %s48, %s49
      %p53 = pneg %p47
      %p54 = scmp.eq.s32.totalorder %s12, 1
      %p55 = por %p53, %p54
      %p56 = scmp.ne.s32.totalorder %s48, %s51
      %p57 = scmp.eq.s32.totalorder %s12, 0
      %p58 = por %p56, %p57
      %p59 = scmp.ne.s32.totalorder %s48, %s51
      %p60 = scmp.eq.s32.totalorder %s17, 1
      %p61 = por %p59, %p60
      %p62 = scmp.ne.s32.totalorder %s51, %s52
      %p63 = scmp.eq.s32.totalorder %s17, 0
      %p64 = por %p62, %p63
      %p65 = scmp.ne.s32.totalorder %s51, %s52
      %p66 = scmp.eq.s32.totalorder %s18, 1
      %p67 = por %p65, %p66
      %p69 = scmp.ne.s32.totalorder %s52, %s68
      %p70 = scmp.eq.s32.totalorder %s18, 0
      %p71 = por %p69, %p70
      %s73 = sadd.s32 %s72, 1
      %p76 = scmp.eq.s32.totalorder %s12, 1
      %p77 = scmp.ne.s32.totalorder %s72, %s74
      %p78 = scmp.eq.s32.totalorder %s12, 0
      %p79 = por %p77, %p78
      %p80 = scmp.ne.s32.totalorder %s72, %s74
      %p81 = scmp.eq.s32.totalorder %s17, 1
      %p82 = por %p80, %p81
      %p83 = scmp.ne.s32.totalorder %s74, %s75
      %p84 = scmp.eq.s32.totalorder %s17, 0
      %p85 = por %p83, %p84
      %p86 = scmp.ne.s32.totalorder %s74, %s75
      %p87 = scmp.eq.s32.totalorder %s18, 1
      %p88 = por %p86, %p87
      %p90 = scmp.ne.s32.totalorder %s75, %s89
      %p91 = scmp.eq.s32.totalorder %s18, 0
      %p92 = por %p90, %p91
      %s93 = ssub.s32 %s12, %s19
      %p94 = scmp.eq.s32.totalorder %s93, 0
      %s96 = sadd.s32 %s95, 1
      %s97 = scalar_select %p94, %s95, %s96
      %p100 = pneg %p94
      %p101 = scmp.eq.s32.totalorder %s12, 1
      %p102 = por %p100, %p101
      %p103 = scmp.ne.s32.totalorder %s95, %s98
      %p104 = scmp.eq.s32.totalorder %s12, 0
      %p105 = por %p103, %p104
      %p106 = scmp.ne.s32.totalorder %s95, %s98
      %p107 = scmp.eq.s32.totalorder %s17, 1
      %p108 = por %p106, %p107
      %p109 = scmp.ne.s32.totalorder %s98, %s99
      %p110 = scmp.eq.s32.totalorder %s17, 0
      %p111 = por %p109, %p110
      %p112 = scmp.ne.s32.totalorder %s98, %s99
      %p113 = scmp.eq.s32.totalorder %s18, 1
      %p114 = por %p112, %p113
      %p116 = scmp.ne.s32.totalorder %s99, %s115
      %p117 = scmp.eq.s32.totalorder %s18, 0
      %p118 = por %p116, %p117
      %p119 = scmp.le.s32.totalorder 1, %s12
      %p120 = scmp.lt.s32.totalorder %s12, 3
      %p121 = pnand %p119, %p120
      %p122 = pneg %p121
      // Predicated region
      $region9: #{tpu_custom_call.1} parent=5 // pred_check
        _
      $region10: #{tpu_custom_call.1} parent=5 // pred_check_branch
        %124 = sbr.rel (%p121) target = $region12
      $region11: #{tpu_custom_call.1} parent=5 // pred_region
        %s125 = ssub.s32 %s12, 1
        // Predicated region
        $region13: #{tpu_custom_call.1} parent=11 // pred_check
          %p126 = pneg %p85
        $region14: #{tpu_custom_call.1} parent=11 // pred_check_branch
          %128 = sbr.rel (%p126) target = $region16
        $region15: #{tpu_custom_call.1} parent=11 // pred_region
          _
        $region16: #{tpu_custom_call.1} parent=11 // pred_fallthru
          _
      $region12: #{tpu_custom_call.1} parent=5 // pred_fallthru
        _
      %p129 = scmp.lt.s32.totalorder %s12, 2
      // Predicated region
      $region17: #{tpu_custom_call.1} parent=5 // pred_check
        %p130 = pneg %p129
      $region18: #{tpu_custom_call.1} parent=5 // pred_check_branch
        %132 = sbr.rel (%p130) target = $region20
      $region19: #{tpu_custom_call.1} parent=5 // pred_region
        // Predicated region
        $region21: #{tpu_custom_call.1} parent=19 // pred_check
          %p133 = pneg %p32
        $region22: #{tpu_custom_call.1} parent=19 // pred_check_branch
          %135 = sbr.rel (%p133) target = $region24
        $region23: #{tpu_custom_call.1} parent=19 // pred_region
          %s136 = smul.u32 32, %s12
          %p137 = scmp.lt.s32.totalorder %s136, 63
          %s138 = scalar_select %p137, %s136, 63
          %s139 = smul.addr %s138, 8
          %s140 = scalar_lea.vmem %s0, %s139
          %s141 = smul.u32 32, %s12
        $region24: #{tpu_custom_call.1} parent=19 // pred_fallthru
          _
        // Predicated region
        $region25: #{tpu_custom_call.1} parent=19 // pred_check
          %p142 = pneg %p58
        $region26: #{tpu_custom_call.1} parent=19 // pred_check_branch
          %144 = sbr.rel (%p142) target = $region28
        $region27: #{tpu_custom_call.1} parent=19 // pred_region
          %s145 = smul.u32 32, %s12
          %p146 = scmp.lt.s32.totalorder %s145, 63
          %s147 = scalar_select %p146, %s145, 63
          %s148 = smul.addr %s147, 8
          %s149 = scalar_lea.vmem %s1, %s148
          %s150 = smul.u32 32, %s12
        $region28: #{tpu_custom_call.1} parent=19 // pred_fallthru
          _
      $region20: #{tpu_custom_call.1} parent=5 // pred_fallthru
        _
      %p151 = scmp.le.s32.totalorder 1, %s12
      %p152 = scmp.lt.s32.totalorder %s12, 3
      %p153 = pnand %p151, %p152
      %p154 = pneg %p153
      // Predicated region
      $region29: #{tpu_custom_call.1} parent=5 // pred_check
        _
      $region30: #{tpu_custom_call.1} parent=5 // pred_check_branch
        %156 = sbr.rel (%p153) target = $region32
      $region31: #{tpu_custom_call.1} parent=5 // pred_region
        %s157 = ssub.s32 %s12, 1
        %s158 = smul.u32 32, %s17
        %p159 = scmp.lt.s32.totalorder %s158, 63
        %s160 = scalar_select %p159, %s158, 63
        %s161 = smul.addr %s160, 8
        %s162 = scalar_lea.vmem %s0, %s161
        %p163 = pneg %p38
        %p164 = pneg %p35
        %s165 = smul.u32 32, %s17
        %p166 = scmp.lt.s32.totalorder %s165, 63
        %s167 = scalar_select %p166, %s165, 63
        %s168 = smul.addr %s167, 8
        %s169 = scalar_lea.vmem %s1, %s168
        %p170 = pneg %p64
        %p171 = pneg %p61
        %p172 = pneg %p85
        %p173 = pneg %p82
        %p174 = pneg %p111
        %p175 = pneg %p108
        %s176 = sand.u32 %s98, 1
        %s177 = scalar_lea.sflag [#allocation3], %s176
        %s178 = sand.u32 %s98, 1
        %s179 = smul.addr %s178, 256
        %s180 = scalar_lea.vmem [#allocation2], %s179
        %s181 = smul.u32 32, %s17
        %p182 = scmp.lt.s32.totalorder %s181, 63
        %s183 = scalar_select %p182, %s181, 63
        %s184 = smul.addr %s183, 8
        %s185 = scalar_lea.vmem %s0, %s184
        %s186 = smul.u32 32, %s17
        %s187 = smul.u32 32, %s17
        %p188 = scmp.lt.s32.totalorder %s187, 63
        %s189 = scalar_select %p188, %s187, 63
        %s190 = smul.addr %s189, 8
        %s191 = scalar_lea.vmem %s1, %s190
        %s192 = smul.u32 32, %s17
        %s193 = smul.u32 32, %s17
        %v194 = vld [vmem:[%s2] sm:$0xff]
        %v195 = vld [vmem:[%s2 + $0x8] sm:$0xff]
        %v196 = vld [vmem:[%s2 + $0x10] sm:$0xff]
        %v197 = vld [vmem:[%s2 + $0x18] sm:$0xff]
        %v198 = vld [vmem:[%s2 + $0x20] sm:$0xff]
        %v199 = vld [vmem:[%s2 + $0x28] sm:$0xff]
        %v200 = vld [vmem:[%s2 + $0x30] sm:$0xff]
        %v201 = vld [vmem:[%s2 + $0x38] sm:$0xff]
        %v202 = vld [vmem:[%s2 + $0x40] sm:$0xff]
        %v203 = vld [vmem:[%s2 + $0x48] sm:$0xff]
        %v204 = vld [vmem:[%s2 + $0x50] sm:$0xff]
        %v205 = vld [vmem:[%s2 + $0x58] sm:$0xff]
        %v206 = vld [vmem:[%s2 + $0x60] sm:$0xff]
        %v207 = vld [vmem:[%s2 + $0x68] sm:$0xff]
        %v208 = vld [vmem:[%s2 + $0x70] sm:$0xff]
        %v209 = vld [vmem:[%s2 + $0x78] sm:$0xff]
        %v210 = vlaneseq
        %v211 = vand.u32 %v210, 127
        %v212 = vld [vmem:[%s185] sm:$0xff]
        %v213 = vld [vmem:[%s185 + $0x8] sm:$0xff]
        %v214 = vld [vmem:[%s185 + $0x10] sm:$0xff]
        %v215 = vld [vmem:[%s185 + $0x18] sm:$0xff]
        %v216 = vld [vmem:[%s185 + $0x20] sm:$0xff]
        %v217 = vld [vmem:[%s185 + $0x28] sm:$0xff]
        %v218 = vld [vmem:[%s185 + $0x30] sm:$0xff]
        %v219 = vld [vmem:[%s185 + $0x38] sm:$0xff]
        %v220 = vld [vmem:[%s185 + $0x40] sm:$0xff]
        %v221 = vld [vmem:[%s185 + $0x48] sm:$0xff]
        %v222 = vld [vmem:[%s185 + $0x50] sm:$0xff]
        %v223 = vld [vmem:[%s185 + $0x58] sm:$0xff]
        %v224 = vld [vmem:[%s185 + $0x60] sm:$0xff]
        %v225 = vld [vmem:[%s185 + $0x68] sm:$0xff]
        %v226 = vld [vmem:[%s185 + $0x70] sm:$0xff]
        %v227 = vld [vmem:[%s185 + $0x78] sm:$0xff]
        %v228 = vld [vmem:[%s185 + $0x80] sm:$0xff]
        %v229 = vld [vmem:[%s185 + $0x88] sm:$0xff]
        %v230 = vld [vmem:[%s185 + $0x90] sm:$0xff]
        %v231 = vld [vmem:[%s185 + $0x98] sm:$0xff]
        %v232 = vld [vmem:[%s185 + $0xa0] sm:$0xff]
        %v233 = vld [vmem:[%s185 + $0xa8] sm:$0xff]
        %v234 = vld [vmem:[%s185 + $0xb0] sm:$0xff]
        %v235 = vld [vmem:[%s185 + $0xb8] sm:$0xff]
        %v236 = vld [vmem:[%s185 + $0xc0] sm:$0xff]
        %v237 = vld [vmem:[%s185 + $0xc8] sm:$0xff]
        %v238 = vld [vmem:[%s185 + $0xd0] sm:$0xff]
        %v239 = vld [vmem:[%s185 + $0xd8] sm:$0xff]
        %v240 = vld [vmem:[%s185 + $0xe0] sm:$0xff]
        %v241 = vld [vmem:[%s185 + $0xe8] sm:$0xff]
        %v242 = vld [vmem:[%s185 + $0xf0] sm:$0xff]
        %v243 = vld [vmem:[%s185 + $0xf8] sm:$0xff]
        %v244 = vld [vmem:[%s191] sm:$0xff]
        %v245 = vld [vmem:[%s191 + $0x8] sm:$0xff]
        %v246 = vld [vmem:[%s191 + $0x10] sm:$0xff]
        %v247 = vld [vmem:[%s191 + $0x18] sm:$0xff]
        %v248 = vld [vmem:[%s191 + $0x20] sm:$0xff]
        %v249 = vld [vmem:[%s191 + $0x28] sm:$0xff]
        %v250 = vld [vmem:[%s191 + $0x30] sm:$0xff]
        %v251 = vld [vmem:[%s191 + $0x38] sm:$0xff]
        %v252 = vld [vmem:[%s191 + $0x40] sm:$0xff]
        %v253 = vld [vmem:[%s191 + $0x48] sm:$0xff]
        %v254 = vld [vmem:[%s191 + $0x50] sm:$0xff]
        %v255 = vld [vmem:[%s191 + $0x58] sm:$0xff]
        %v256 = vld [vmem:[%s191 + $0x60] sm:$0xff]
        %v257 = vld [vmem:[%s191 + $0x68] sm:$0xff]
        %v258 = vld [vmem:[%s191 + $0x70] sm:$0xff]
        %v259 = vld [vmem:[%s191 + $0x78] sm:$0xff]
        %v260 = vld [vmem:[%s191 + $0x80] sm:$0xff]
        %v261 = vld [vmem:[%s191 + $0x88] sm:$0xff]
        %v262 = vld [vmem:[%s191 + $0x90] sm:$0xff]
        %v263 = vld [vmem:[%s191 + $0x98] sm:$0xff]
        %v264 = vld [vmem:[%s191 + $0xa0] sm:$0xff]
        %v265 = vld [vmem:[%s191 + $0xa8] sm:$0xff]
        %v266 = vld [vmem:[%s191 + $0xb0] sm:$0xff]
        %v267 = vld [vmem:[%s191 + $0xb8] sm:$0xff]
        %v268 = vld [vmem:[%s191 + $0xc0] sm:$0xff]
        %v269 = vld [vmem:[%s191 + $0xc8] sm:$0xff]
        %v270 = vld [vmem:[%s191 + $0xd0] sm:$0xff]
        %v271 = vld [vmem:[%s191 + $0xd8] sm:$0xff]
        %v272 = vld [vmem:[%s191 + $0xe0] sm:$0xff]
        %v273 = vld [vmem:[%s191 + $0xe8] sm:$0xff]
        %v274 = vld [vmem:[%s191 + $0xf0] sm:$0xff]
        %v275 = vld [vmem:[%s191 + $0xf8] sm:$0xff]
        %276 = vset.pattern.permute.xlu0 0
        %277 = vperm.xlu0 %276, %v212
        %v278 = vpop.permute.xlu0 %277
        %279 = vset.pattern.permute.xlu0 0
        %280 = vperm.xlu0 %279, %v213
        %v281 = vpop.permute.xlu0 %280
        %282 = vset.pattern.permute.xlu0 0
        %283 = vperm.xlu0 %282, %v214
        %v284 = vpop.permute.xlu0 %283
        %285 = vset.pattern.permute.xlu0 0
        %286 = vperm.xlu0 %285, %v215
        %v287 = vpop.permute.xlu0 %286
        %288 = vset.pattern.permute.xlu0 0
        %289 = vperm.xlu0 %288, %v216
        %v290 = vpop.permute.xlu0 %289
        %291 = vset.pattern.permute.xlu0 0
        %292 = vperm.xlu0 %291, %v217
        %v293 = vpop.permute.xlu0 %292
        %294 = vset.pattern.permute.xlu0 0
        %295 = vperm.xlu0 %294, %v218
        %v296 = vpop.permute.xlu0 %295
        %297 = vset.pattern.permute.xlu0 0
        %298 = vperm.xlu0 %297, %v219
        %v299 = vpop.permute.xlu0 %298
        %300 = vset.pattern.permute.xlu0 0
        %301 = vperm.xlu0 %300, %v220
        %v302 = vpop.permute.xlu0 %301
        %303 = vset.pattern.permute.xlu0 0
        %304 = vperm.xlu0 %303, %v221
        %v305 = vpop.permute.xlu0 %304
        %306 = vset.pattern.permute.xlu0 0
        %307 = vperm.xlu0 %306, %v222
        %v308 = vpop.permute.xlu0 %307
        %309 = vset.pattern.permute.xlu0 0
        %310 = vperm.xlu0 %309, %v223
        %v311 = vpop.permute.xlu0 %310
        %312 = vset.pattern.permute.xlu0 0
        %313 = vperm.xlu0 %312, %v224
        %v314 = vpop.permute.xlu0 %313
        %315 = vset.pattern.permute.xlu0 0
        %316 = vperm.xlu0 %315, %v225
        %v317 = vpop.permute.xlu0 %316
        %318 = vset.pattern.permute.xlu0 0
        %319 = vperm.xlu0 %318, %v226
        %v320 = vpop.permute.xlu0 %319
        %321 = vset.pattern.permute.xlu0 0
        %322 = vperm.xlu0 %321, %v227
        %v323 = vpop.permute.xlu0 %322
        %324 = vset.pattern.permute.xlu0 0
        %325 = vperm.xlu0 %324, %v228
        %v326 = vpop.permute.xlu0 %325
        %327 = vset.pattern.permute.xlu0 0
        %328 = vperm.xlu0 %327, %v229
        %v329 = vpop.permute.xlu0 %328
        %330 = vset.pattern.permute.xlu0 0
        %331 = vperm.xlu0 %330, %v230
        %v332 = vpop.permute.xlu0 %331
        %333 = vset.pattern.permute.xlu0 0
        %334 = vperm.xlu0 %333, %v231
        %v335 = vpop.permute.xlu0 %334
        %336 = vset.pattern.permute.xlu0 0
        %337 = vperm.xlu0 %336, %v232
        %v338 = vpop.permute.xlu0 %337
        %339 = vset.pattern.permute.xlu0 0
        %340 = vperm.xlu0 %339, %v233
        %v341 = vpop.permute.xlu0 %340
        %342 = vset.pattern.permute.xlu0 0
        %343 = vperm.xlu0 %342, %v234
        %v344 = vpop.permute.xlu0 %343
        %345 = vset.pattern.permute.xlu0 0
        %346 = vperm.xlu0 %345, %v235
        %v347 = vpop.permute.xlu0 %346
        %348 = vset.pattern.permute.xlu0 0
        %349 = vperm.xlu0 %348, %v236
        %v350 = vpop.permute.xlu0 %349
        %351 = vset.pattern.permute.xlu0 0
        %352 = vperm.xlu0 %351, %v237
        %v353 = vpop.permute.xlu0 %352
        %354 = vset.pattern.permute.xlu0 0
        %355 = vperm.xlu0 %354, %v238
        %v356 = vpop.permute.xlu0 %355
        %357 = vset.pattern.permute.xlu0 0
        %358 = vperm.xlu0 %357, %v239
        %v359 = vpop.permute.xlu0 %358
        %360 = vset.pattern.permute.xlu0 0
        %361 = vperm.xlu0 %360, %v240
        %v362 = vpop.permute.xlu0 %361
        %363 = vset.pattern.permute.xlu0 0
        %364 = vperm.xlu0 %363, %v241
        %v365 = vpop.permute.xlu0 %364
        %366 = vset.pattern.permute.xlu0 0
        %367 = vperm.xlu0 %366, %v242
        %v368 = vpop.permute.xlu0 %367
        %369 = vset.pattern.permute.xlu0 0
        %370 = vperm.xlu0 %369, %v243
        %v371 = vpop.permute.xlu0 %370
        %vm372 = vcmp.eq.s32.totalorder %v211, %v278
        %vm373 = vcmp.eq.s32.totalorder %v211, %v281
        %vm374 = vcmp.eq.s32.totalorder %v211, %v284
        %vm375 = vcmp.eq.s32.totalorder %v211, %v287
        %vm376 = vcmp.eq.s32.totalorder %v211, %v290
        %vm377 = vcmp.eq.s32.totalorder %v211, %v293
        %vm378 = vcmp.eq.s32.totalorder %v211, %v296
        %vm379 = vcmp.eq.s32.totalorder %v211, %v299
        %vm380 = vcmp.eq.s32.totalorder %v211, %v302
        %vm381 = vcmp.eq.s32.totalorder %v211, %v305
        %vm382 = vcmp.eq.s32.totalorder %v211, %v308
        %vm383 = vcmp.eq.s32.totalorder %v211, %v311
        %vm384 = vcmp.eq.s32.totalorder %v211, %v314
        %vm385 = vcmp.eq.s32.totalorder %v211, %v317
        %vm386 = vcmp.eq.s32.totalorder %v211, %v320
        %vm387 = vcmp.eq.s32.totalorder %v211, %v323
        %vm388 = vcmp.eq.s32.totalorder %v211, %v326
        %vm389 = vcmp.eq.s32.totalorder %v211, %v329
        %vm390 = vcmp.eq.s32.totalorder %v211, %v332
        %vm391 = vcmp.eq.s32.totalorder %v211, %v335
        %vm392 = vcmp.eq.s32.totalorder %v211, %v338
        %vm393 = vcmp.eq.s32.totalorder %v211, %v341
        %vm394 = vcmp.eq.s32.totalorder %v211, %v344
        %vm395 = vcmp.eq.s32.totalorder %v211, %v347
        %vm396 = vcmp.eq.s32.totalorder %v211, %v350
        %vm397 = vcmp.eq.s32.totalorder %v211, %v353
        %vm398 = vcmp.eq.s32.totalorder %v211, %v356
        %vm399 = vcmp.eq.s32.totalorder %v211, %v359
        %vm400 = vcmp.eq.s32.totalorder %v211, %v362
        %vm401 = vcmp.eq.s32.totalorder %v211, %v365
        %vm402 = vcmp.eq.s32.totalorder %v211, %v368
        %vm403 = vcmp.eq.s32.totalorder %v211, %v371
        %v404 = vsel %vm372, 1, 0
        %v405 = vsel %vm373, 1, 0
        %v406 = vsel %vm374, 1, 0
        %v407 = vsel %vm375, 1, 0
        %v408 = vsel %vm376, 1, 0
        %v409 = vsel %vm377, 1, 0
        %v410 = vsel %vm378, 1, 0
        %v411 = vsel %vm379, 1, 0
        %v412 = vsel %vm380, 1, 0
        %v413 = vsel %vm381, 1, 0
        %v414 = vsel %vm382, 1, 0
        %v415 = vsel %vm383, 1, 0
        %v416 = vsel %vm384, 1, 0
        %v417 = vsel %vm385, 1, 0
        %v418 = vsel %vm386, 1, 0
        %v419 = vsel %vm387, 1, 0
        %v420 = vsel %vm388, 1, 0
        %v421 = vsel %vm389, 1, 0
        %v422 = vsel %vm390, 1, 0
        %v423 = vsel %vm391, 1, 0
        %v424 = vsel %vm392, 1, 0
        %v425 = vsel %vm393, 1, 0
        %v426 = vsel %vm394, 1, 0
        %v427 = vsel %vm395, 1, 0
        %v428 = vsel %vm396, 1, 0
        %v429 = vsel %vm397, 1, 0
        %v430 = vsel %vm398, 1, 0
        %v431 = vsel %vm399, 1, 0
        %v432 = vsel %vm400, 1, 0
        %v433 = vsel %vm401, 1, 0
        %v434 = vsel %vm402, 1, 0
        %v435 = vsel %vm403, 1, 0
        %v436 = vcvt.s32.f32 %v404
        %v437 = vcvt.s32.f32 %v405
        %v438 = vcvt.s32.f32 %v406
        %v439 = vcvt.s32.f32 %v407
        %v440 = vcvt.s32.f32 %v408
        %v441 = vcvt.s32.f32 %v409
        %v442 = vcvt.s32.f32 %v410
        %v443 = vcvt.s32.f32 %v411
        %v444 = vcvt.s32.f32 %v412
        %v445 = vcvt.s32.f32 %v413
        %v446 = vcvt.s32.f32 %v414
        %v447 = vcvt.s32.f32 %v415
        %v448 = vcvt.s32.f32 %v416
        %v449 = vcvt.s32.f32 %v417
        %v450 = vcvt.s32.f32 %v418
        %v451 = vcvt.s32.f32 %v419
        %v452 = vcvt.s32.f32 %v420
        %v453 = vcvt.s32.f32 %v421
        %v454 = vcvt.s32.f32 %v422
        %v455 = vcvt.s32.f32 %v423
        %v456 = vcvt.s32.f32 %v424
        %v457 = vcvt.s32.f32 %v425
        %v458 = vcvt.s32.f32 %v426
        %v459 = vcvt.s32.f32 %v427
        %v460 = vcvt.s32.f32 %v428
        %v461 = vcvt.s32.f32 %v429
        %v462 = vcvt.s32.f32 %v430
        %v463 = vcvt.s32.f32 %v431
        %v464 = vcvt.s32.f32 %v432
        %v465 = vcvt.s32.f32 %v433
        %v466 = vcvt.s32.f32 %v434
        %v467 = vcvt.s32.f32 %v435
        %468 = vset.pattern.permute.xlu0 0
        %469 = vperm.xlu0 %468, %v244
        %v470 = vpop.permute.xlu0 %469
        %471 = vset.pattern.permute.xlu0 0
        %472 = vperm.xlu0 %471, %v245
        %v473 = vpop.permute.xlu0 %472
        %474 = vset.pattern.permute.xlu0 0
        %475 = vperm.xlu0 %474, %v246
        %v476 = vpop.permute.xlu0 %475
        %477 = vset.pattern.permute.xlu0 0
        %478 = vperm.xlu0 %477, %v247
        %v479 = vpop.permute.xlu0 %478
        %480 = vset.pattern.permute.xlu0 0
        %481 = vperm.xlu0 %480, %v248
        %v482 = vpop.permute.xlu0 %481
        %483 = vset.pattern.permute.xlu0 0
        %484 = vperm.xlu0 %483, %v249
        %v485 = vpop.permute.xlu0 %484
        %486 = vset.pattern.permute.xlu0 0
        %487 = vperm.xlu0 %486, %v250
        %v488 = vpop.permute.xlu0 %487
        %489 = vset.pattern.permute.xlu0 0
        %490 = vperm.xlu0 %489, %v251
        %v491 = vpop.permute.xlu0 %490
        %492 = vset.pattern.permute.xlu0 0
        %493 = vperm.xlu0 %492, %v252
        %v494 = vpop.permute.xlu0 %493
        %495 = vset.pattern.permute.xlu0 0
        %496 = vperm.xlu0 %495, %v253
        %v497 = vpop.permute.xlu0 %496
        %498 = vset.pattern.permute.xlu0 0
        %499 = vperm.xlu0 %498, %v254
        %v500 = vpop.permute.xlu0 %499
        %501 = vset.pattern.permute.xlu0 0
        %502 = vperm.xlu0 %501, %v255
        %v503 = vpop.permute.xlu0 %502
        %504 = vset.pattern.permute.xlu0 0
        %505 = vperm.xlu0 %504, %v256
        %v506 = vpop.permute.xlu0 %505
        %507 = vset.pattern.permute.xlu0 0
        %508 = vperm.xlu0 %507, %v257
        %v509 = vpop.permute.xlu0 %508
        %510 = vset.pattern.permute.xlu0 0
        %511 = vperm.xlu0 %510, %v258
        %v512 = vpop.permute.xlu0 %511
        %513 = vset.pattern.permute.xlu0 0
        %514 = vperm.xlu0 %513, %v259
        %v515 = vpop.permute.xlu0 %514
        %516 = vset.pattern.permute.xlu0 0
        %517 = vperm.xlu0 %516, %v260
        %v518 = vpop.permute.xlu0 %517
        %519 = vset.pattern.permute.xlu0 0
        %520 = vperm.xlu0 %519, %v261
        %v521 = vpop.permute.xlu0 %520
        %522 = vset.pattern.permute.xlu0 0
        %523 = vperm.xlu0 %522, %v262
        %v524 = vpop.permute.xlu0 %523
        %525 = vset.pattern.permute.xlu0 0
        %526 = vperm.xlu0 %525, %v263
        %v527 = vpop.permute.xlu0 %526
        %528 = vset.pattern.permute.xlu0 0
        %529 = vperm.xlu0 %528, %v264
        %v530 = vpop.permute.xlu0 %529
        %531 = vset.pattern.permute.xlu0 0
        %532 = vperm.xlu0 %531, %v265
        %v533 = vpop.permute.xlu0 %532
        %534 = vset.pattern.permute.xlu0 0
        %535 = vperm.xlu0 %534, %v266
        %v536 = vpop.permute.xlu0 %535
        %537 = vset.pattern.permute.xlu0 0
        %538 = vperm.xlu0 %537, %v267
        %v539 = vpop.permute.xlu0 %538
        %540 = vset.pattern.permute.xlu0 0
        %541 = vperm.xlu0 %540, %v268
        %v542 = vpop.permute.xlu0 %541
        %543 = vset.pattern.permute.xlu0 0
        %544 = vperm.xlu0 %543, %v269
        %v545 = vpop.permute.xlu0 %544
        %546 = vset.pattern.permute.xlu0 0
        %547 = vperm.xlu0 %546, %v270
        %v548 = vpop.permute.xlu0 %547
        %549 = vset.pattern.permute.xlu0 0
        %550 = vperm.xlu0 %549, %v271
        %v551 = vpop.permute.xlu0 %550
        %552 = vset.pattern.permute.xlu0 0
        %553 = vperm.xlu0 %552, %v272
        %v554 = vpop.permute.xlu0 %553
        %555 = vset.pattern.permute.xlu0 0
        %556 = vperm.xlu0 %555, %v273
        %v557 = vpop.permute.xlu0 %556
        %558 = vset.pattern.permute.xlu0 0
        %559 = vperm.xlu0 %558, %v274
        %v560 = vpop.permute.xlu0 %559
        %561 = vset.pattern.permute.xlu0 0
        %562 = vperm.xlu0 %561, %v275
        %v563 = vpop.permute.xlu0 %562
        %vm564 = vcmp.eq.s32.totalorder %v211, %v470
        %vm565 = vcmp.eq.s32.totalorder %v211, %v473
        %vm566 = vcmp.eq.s32.totalorder %v211, %v476
        %vm567 = vcmp.eq.s32.totalorder %v211, %v479
        %vm568 = vcmp.eq.s32.totalorder %v211, %v482
        %vm569 = vcmp.eq.s32.totalorder %v211, %v485
        %vm570 = vcmp.eq.s32.totalorder %v211, %v488
        %vm571 = vcmp.eq.s32.totalorder %v211, %v491
        %vm572 = vcmp.eq.s32.totalorder %v211, %v494
        %vm573 = vcmp.eq.s32.totalorder %v211, %v497
        %vm574 = vcmp.eq.s32.totalorder %v211, %v500
        %vm575 = vcmp.eq.s32.totalorder %v211, %v503
        %vm576 = vcmp.eq.s32.totalorder %v211, %v506
        %vm577 = vcmp.eq.s32.totalorder %v211, %v509
        %vm578 = vcmp.eq.s32.totalorder %v211, %v512
        %vm579 = vcmp.eq.s32.totalorder %v211, %v515
        %vm580 = vcmp.eq.s32.totalorder %v211, %v518
        %vm581 = vcmp.eq.s32.totalorder %v211, %v521
        %vm582 = vcmp.eq.s32.totalorder %v211, %v524
        %vm583 = vcmp.eq.s32.totalorder %v211, %v527
        %vm584 = vcmp.eq.s32.totalorder %v211, %v530
        %vm585 = vcmp.eq.s32.totalorder %v211, %v533
        %vm586 = vcmp.eq.s32.totalorder %v211, %v536
        %vm587 = vcmp.eq.s32.totalorder %v211, %v539
        %vm588 = vcmp.eq.s32.totalorder %v211, %v542
        %vm589 = vcmp.eq.s32.totalorder %v211, %v545
        %vm590 = vcmp.eq.s32.totalorder %v211, %v548
        %vm591 = vcmp.eq.s32.totalorder %v211, %v551
        %vm592 = vcmp.eq.s32.totalorder %v211, %v554
        %vm593 = vcmp.eq.s32.totalorder %v211, %v557
        %vm594 = vcmp.eq.s32.totalorder %v211, %v560
        %vm595 = vcmp.eq.s32.totalorder %v211, %v563
        %v596 = vsel %vm564, 1, 0
        %v597 = vsel %vm565, 1, 0
        %v598 = vsel %vm566, 1, 0
        %v599 = vsel %vm567, 1, 0
        %v600 = vsel %vm568, 1, 0
        %v601 = vsel %vm569, 1, 0
        %v602 = vsel %vm570, 1, 0
        %v603 = vsel %vm571, 1, 0
        %v604 = vsel %vm572, 1, 0
        %v605 = vsel %vm573, 1, 0
        %v606 = vsel %vm574, 1, 0
        %v607 = vsel %vm575, 1, 0
        %v608 = vsel %vm576, 1, 0
        %v609 = vsel %vm577, 1, 0
        %v610 = vsel %vm578, 1, 0
        %v611 = vsel %vm579, 1, 0
        %v612 = vsel %vm580, 1, 0
        %v613 = vsel %vm581, 1, 0
        %v614 = vsel %vm582, 1, 0
        %v615 = vsel %vm583, 1, 0
        %v616 = vsel %vm584, 1, 0
        %v617 = vsel %vm585, 1, 0
        %v618 = vsel %vm586, 1, 0
        %v619 = vsel %vm587, 1, 0
        %v620 = vsel %vm588, 1, 0
        %v621 = vsel %vm589, 1, 0
        %v622 = vsel %vm590, 1, 0
        %v623 = vsel %vm591, 1, 0
        %v624 = vsel %vm592, 1, 0
        %v625 = vsel %vm593, 1, 0
        %v626 = vsel %vm594, 1, 0
        %v627 = vsel %vm595, 1, 0
        %v628 = vcvt.s32.f32 %v596
        %v629 = vcvt.s32.f32 %v597
        %v630 = vcvt.s32.f32 %v598
        %v631 = vcvt.s32.f32 %v599
        %v632 = vcvt.s32.f32 %v600
        %v633 = vcvt.s32.f32 %v601
        %v634 = vcvt.s32.f32 %v602
        %v635 = vcvt.s32.f32 %v603
        %v636 = vcvt.s32.f32 %v604
        %v637 = vcvt.s32.f32 %v605
        %v638 = vcvt.s32.f32 %v606
        %v639 = vcvt.s32.f32 %v607
        %v640 = vcvt.s32.f32 %v608
        %v641 = vcvt.s32.f32 %v609
        %v642 = vcvt.s32.f32 %v610
        %v643 = vcvt.s32.f32 %v611
        %v644 = vcvt.s32.f32 %v612
        %v645 = vcvt.s32.f32 %v613
        %v646 = vcvt.s32.f32 %v614
        %v647 = vcvt.s32.f32 %v615
        %v648 = vcvt.s32.f32 %v616
        %v649 = vcvt.s32.f32 %v617
        %v650 = vcvt.s32.f32 %v618
        %v651 = vcvt.s32.f32 %v619
        %v652 = vcvt.s32.f32 %v620
        %v653 = vcvt.s32.f32 %v621
        %v654 = vcvt.s32.f32 %v622
        %v655 = vcvt.s32.f32 %v623
        %v656 = vcvt.s32.f32 %v624
        %v657 = vcvt.s32.f32 %v625
        %v658 = vcvt.s32.f32 %v626
        %v659 = vcvt.s32.f32 %v627
        %v660 = vadd.f32 %v436, %v628
        %v661 = vadd.f32 %v437, %v629
        %v662 = vadd.f32 %v438, %v630
        %v663 = vadd.f32 %v439, %v631
        %v664 = vadd.f32 %v440, %v632
        %v665 = vadd.f32 %v441, %v633
        %v666 = vadd.f32 %v442, %v634
        %v667 = vadd.f32 %v443, %v635
        %v668 = vadd.f32 %v444, %v636
        %v669 = vadd.f32 %v445, %v637
        %v670 = vadd.f32 %v446, %v638
        %v671 = vadd.f32 %v447, %v639
        %v672 = vadd.f32 %v448, %v640
        %v673 = vadd.f32 %v449, %v641
        %v674 = vadd.f32 %v450, %v642
        %v675 = vadd.f32 %v451, %v643
        %v676 = vadd.f32 %v452, %v644
        %v677 = vadd.f32 %v453, %v645
        %v678 = vadd.f32 %v454, %v646
        %v679 = vadd.f32 %v455, %v647
        %v680 = vadd.f32 %v456, %v648
        %v681 = vadd.f32 %v457, %v649
        %v682 = vadd.f32 %v458, %v650
        %v683 = vadd.f32 %v459, %v651
        %v684 = vadd.f32 %v460, %v652
        %v685 = vadd.f32 %v461, %v653
        %v686 = vadd.f32 %v462, %v654
        %v687 = vadd.f32 %v463, %v655
        %v688 = vadd.f32 %v464, %v656
        %v689 = vadd.f32 %v465, %v657
        %v690 = vadd.f32 %v466, %v658
        %v691 = vadd.f32 %v467, %v659
        %692 = vmatpush.msra.mxu0 %v209
        %693 = vmatpush.msra.mxu0 %v208
        %694 = vmatpush.msra.mxu0 %v207
        %695 = vmatpush.msra.mxu0 %v206
        %696 = vmatpush.msra.mxu0 %v205
        %697 = vmatpush.msra.mxu0 %v204
        %698 = vmatpush.msra.mxu0 %v203
        %699 = vmatpush.msra.mxu0 %v202
        %700 = vmatpush.msra.mxu0 %v201
        %701 = vmatpush.msra.mxu0 %v200
        %702 = vmatpush.msra.mxu0 %v199
        %703 = vmatpush.msra.mxu0 %v198
        %704 = vmatpush.msra.mxu0 %v197
        %705 = vmatpush.msra.mxu0 %v196
        %706 = vmatpush.msra.mxu0 %v195
        %707 = vmatpush.msra.mxu0 %v194
        %708 = vmatmul.f32.gmra.mxu0 %v660
        %v709 = vpop.f32.mrf.mxu0
        %v710 = vadd.f32 0.0, %v709
        %711 = vmatmul.f32.gmra.mxu0 %v661
        %v712 = vpop.f32.mrf.mxu0
        %v713 = vadd.f32 0.0, %v712
        %714 = vmatmul.f32.gmra.mxu0 %v662
        %v715 = vpop.f32.mrf.mxu0
        %v716 = vadd.f32 0.0, %v715
        %717 = vmatmul.f32.gmra.mxu0 %v663
        %v718 = vpop.f32.mrf.mxu0
        %v719 = vadd.f32 0.0, %v718
        %720 = vmatmul.f32.gmra.mxu0 %v664
        %v721 = vpop.f32.mrf.mxu0
        %v722 = vadd.f32 0.0, %v721
        %723 = vmatmul.f32.gmra.mxu0 %v665
        %v724 = vpop.f32.mrf.mxu0
        %v725 = vadd.f32 0.0, %v724
        %726 = vmatmul.f32.gmra.mxu0 %v666
        %v727 = vpop.f32.mrf.mxu0
        %v728 = vadd.f32 0.0, %v727
        %729 = vmatmul.f32.gmra.mxu0 %v667
        %v730 = vpop.f32.mrf.mxu0
        %v731 = vadd.f32 0.0, %v730
        %732 = vmatmul.f32.gmra.mxu0 %v668
        %v733 = vpop.f32.mrf.mxu0
        %v734 = vadd.f32 0.0, %v733
        %735 = vmatmul.f32.gmra.mxu0 %v669
        %v736 = vpop.f32.mrf.mxu0
        %v737 = vadd.f32 0.0, %v736
        %738 = vmatmul.f32.gmra.mxu0 %v670
        %v739 = vpop.f32.mrf.mxu0
        %v740 = vadd.f32 0.0, %v739
        %741 = vmatmul.f32.gmra.mxu0 %v671
        %v742 = vpop.f32.mrf.mxu0
        %v743 = vadd.f32 0.0, %v742
        %744 = vmatmul.f32.gmra.mxu0 %v672
        %v745 = vpop.f32.mrf.mxu0
        %v746 = vadd.f32 0.0, %v745
        %747 = vmatmul.f32.gmra.mxu0 %v673
        %v748 = vpop.f32.mrf.mxu0
        %v749 = vadd.f32 0.0, %v748
        %750 = vmatmul.f32.gmra.mxu0 %v674
        %v751 = vpop.f32.mrf.mxu0
        %v752 = vadd.f32 0.0, %v751
        %753 = vmatmul.f32.gmra.mxu0 %v675
        %v754 = vpop.f32.mrf.mxu0
        %v755 = vadd.f32 0.0, %v754
        %756 = vmatmul.f32.gmra.mxu0 %v676
        %v757 = vpop.f32.mrf.mxu0
        %v758 = vadd.f32 0.0, %v757
        %759 = vmatmul.f32.gmra.mxu0 %v677
        %v760 = vpop.f32.mrf.mxu0
        %v761 = vadd.f32 0.0, %v760
        %762 = vmatmul.f32.gmra.mxu0 %v678
        %v763 = vpop.f32.mrf.mxu0
        %v764 = vadd.f32 0.0, %v763
        %765 = vmatmul.f32.gmra.mxu0 %v679
        %v766 = vpop.f32.mrf.mxu0
        %v767 = vadd.f32 0.0, %v766
        %768 = vmatmul.f32.gmra.mxu0 %v680
        %v769 = vpop.f32.mrf.mxu0
        %v770 = vadd.f32 0.0, %v769
        %771 = vmatmul.f32.gmra.mxu0 %v681
        %v772 = vpop.f32.mrf.mxu0
        %v773 = vadd.f32 0.0, %v772
        %774 = vmatmul.f32.gmra.mxu0 %v682
        %v775 = vpop.f32.mrf.mxu0
        %v776 = vadd.f32 0.0, %v775
        %777 = vmatmul.f32.gmra.mxu0 %v683
        %v778 = vpop.f32.mrf.mxu0
        %v779 = vadd.f32 0.0, %v778
        %780 = vmatmul.f32.gmra.mxu0 %v684
        %v781 = vpop.f32.mrf.mxu0
        %v782 = vadd.f32 0.0, %v781
        %783 = vmatmul.f32.gmra.mxu0 %v685
        %v784 = vpop.f32.mrf.mxu0
        %v785 = vadd.f32 0.0, %v784
        %786 = vmatmul.f32.gmra.mxu0 %v686
        %v787 = vpop.f32.mrf.mxu0
        %v788 = vadd.f32 0.0, %v787
        %789 = vmatmul.f32.gmra.mxu0 %v687
        %v790 = vpop.f32.mrf.mxu0
        %v791 = vadd.f32 0.0, %v790
        %792 = vmatmul.f32.gmra.mxu0 %v688
        %v793 = vpop.f32.mrf.mxu0
        %v794 = vadd.f32 0.0, %v793
        %795 = vmatmul.f32.gmra.mxu0 %v689
        %v796 = vpop.f32.mrf.mxu0
        %v797 = vadd.f32 0.0, %v796
        %798 = vmatmul.f32.gmra.mxu0 %v690
        %v799 = vpop.f32.mrf.mxu0
        %v800 = vadd.f32 0.0, %v799
        %801 = vmatmul.f32.gmra.mxu0 %v691
        %v802 = vpop.f32.mrf.mxu0
        %v803 = vadd.f32 0.0, %v802
        %804 = vdwg.mxu0
        %v805 = vmax.f32 %v710, 0.0
        %v806 = vmax.f32 %v713, 0.0
        %v807 = vmax.f32 %v716, 0.0
        %v808 = vmax.f32 %v719, 0.0
        %v809 = vmax.f32 %v722, 0.0
        %v810 = vmax.f32 %v725, 0.0
        %v811 = vmax.f32 %v728, 0.0
        %v812 = vmax.f32 %v731, 0.0
        %v813 = vmax.f32 %v734, 0.0
        %v814 = vmax.f32 %v737, 0.0
        %v815 = vmax.f32 %v740, 0.0
        %v816 = vmax.f32 %v743, 0.0
        %v817 = vmax.f32 %v746, 0.0
        %v818 = vmax.f32 %v749, 0.0
        %v819 = vmax.f32 %v752, 0.0
        %v820 = vmax.f32 %v755, 0.0
        %v821 = vmax.f32 %v758, 0.0
        %v822 = vmax.f32 %v761, 0.0
        %v823 = vmax.f32 %v764, 0.0
        %v824 = vmax.f32 %v767, 0.0
        %v825 = vmax.f32 %v770, 0.0
        %v826 = vmax.f32 %v773, 0.0
        %v827 = vmax.f32 %v776, 0.0
        %v828 = vmax.f32 %v779, 0.0
        %v829 = vmax.f32 %v782, 0.0
        %v830 = vmax.f32 %v785, 0.0
        %v831 = vmax.f32 %v788, 0.0
        %v832 = vmax.f32 %v791, 0.0
        %v833 = vmax.f32 %v794, 0.0
        %v834 = vmax.f32 %v797, 0.0
        %v835 = vmax.f32 %v800, 0.0
        %v836 = vmax.f32 %v803, 0.0
        %837 = vset.pattern.permute.xlu0 1
        %838 = vperm.xlu0 %837, %v212
        %v839 = vpop.permute.xlu0 %838
        %840 = vset.pattern.permute.xlu0 1
        %841 = vperm.xlu0 %840, %v213
        %v842 = vpop.permute.xlu0 %841
        %843 = vset.pattern.permute.xlu0 1
        %844 = vperm.xlu0 %843, %v214
        %v845 = vpop.permute.xlu0 %844
        %846 = vset.pattern.permute.xlu0 1
        %847 = vperm.xlu0 %846, %v215
        %v848 = vpop.permute.xlu0 %847
        %849 = vset.pattern.permute.xlu0 1
        %850 = vperm.xlu0 %849, %v216
        %v851 = vpop.permute.xlu0 %850
        %852 = vset.pattern.permute.xlu0 1
        %853 = vperm.xlu0 %852, %v217
        %v854 = vpop.permute.xlu0 %853
        %855 = vset.pattern.permute.xlu0 1
        %856 = vperm.xlu0 %855, %v218
        %v857 = vpop.permute.xlu0 %856
        %858 = vset.pattern.permute.xlu0 1
        %859 = vperm.xlu0 %858, %v219
        %v860 = vpop.permute.xlu0 %859
        %861 = vset.pattern.permute.xlu0 1
        %862 = vperm.xlu0 %861, %v220
        %v863 = vpop.permute.xlu0 %862
        %864 = vset.pattern.permute.xlu0 1
        %865 = vperm.xlu0 %864, %v221
        %v866 = vpop.permute.xlu0 %865
        %867 = vset.pattern.permute.xlu0 1
        %868 = vperm.xlu0 %867, %v222
        %v869 = vpop.permute.xlu0 %868
        %870 = vset.pattern.permute.xlu0 1
        %871 = vperm.xlu0 %870, %v223
        %v872 = vpop.permute.xlu0 %871
        %873 = vset.pattern.permute.xlu0 1
        %874 = vperm.xlu0 %873, %v224
        %v875 = vpop.permute.xlu0 %874
        %876 = vset.pattern.permute.xlu0 1
        %877 = vperm.xlu0 %876, %v225
        %v878 = vpop.permute.xlu0 %877
        %879 = vset.pattern.permute.xlu0 1
        %880 = vperm.xlu0 %879, %v226
        %v881 = vpop.permute.xlu0 %880
        %882 = vset.pattern.permute.xlu0 1
        %883 = vperm.xlu0 %882, %v227
        %v884 = vpop.permute.xlu0 %883
        %885 = vset.pattern.permute.xlu0 1
        %886 = vperm.xlu0 %885, %v228
        %v887 = vpop.permute.xlu0 %886
        %888 = vset.pattern.permute.xlu0 1
        %889 = vperm.xlu0 %888, %v229
        %v890 = vpop.permute.xlu0 %889
        %891 = vset.pattern.permute.xlu0 1
        %892 = vperm.xlu0 %891, %v230
        %v893 = vpop.permute.xlu0 %892
        %894 = vset.pattern.permute.xlu0 1
        %895 = vperm.xlu0 %894, %v231
        %v896 = vpop.permute.xlu0 %895
        %897 = vset.pattern.permute.xlu0 1
        %898 = vperm.xlu0 %897, %v232
        %v899 = vpop.permute.xlu0 %898
        %900 = vset.pattern.permute.xlu0 1
        %901 = vperm.xlu0 %900, %v233
        %v902 = vpop.permute.xlu0 %901
        %903 = vset.pattern.permute.xlu0 1
        %904 = vperm.xlu0 %903, %v234
        %v905 = vpop.permute.xlu0 %904
        %906 = vset.pattern.permute.xlu0 1
        %907 = vperm.xlu0 %906, %v235
        %v908 = vpop.permute.xlu0 %907
        %909 = vset.pattern.permute.xlu0 1
        %910 = vperm.xlu0 %909, %v236
        %v911 = vpop.permute.xlu0 %910
        %912 = vset.pattern.permute.xlu0 1
        %913 = vperm.xlu0 %912, %v237
        %v914 = vpop.permute.xlu0 %913
        %915 = vset.pattern.permute.xlu0 1
        %916 = vperm.xlu0 %915, %v238
        %v917 = vpop.permute.xlu0 %916
        %918 = vset.pattern.permute.xlu0 1
        %919 = vperm.xlu0 %918, %v239
        %v920 = vpop.permute.xlu0 %919
        %921 = vset.pattern.permute.xlu0 1
        %922 = vperm.xlu0 %921, %v240
        %v923 = vpop.permute.xlu0 %922
        %924 = vset.pattern.permute.xlu0 1
        %925 = vperm.xlu0 %924, %v241
        %v926 = vpop.permute.xlu0 %925
        %927 = vset.pattern.permute.xlu0 1
        %928 = vperm.xlu0 %927, %v242
        %v929 = vpop.permute.xlu0 %928
        %930 = vset.pattern.permute.xlu0 1
        %931 = vperm.xlu0 %930, %v243
        %v932 = vpop.permute.xlu0 %931
        %vm933 = vcmp.eq.s32.totalorder %v211, %v839
        %vm934 = vcmp.eq.s32.totalorder %v211, %v842
        %vm935 = vcmp.eq.s32.totalorder %v211, %v845
        %vm936 = vcmp.eq.s32.totalorder %v211, %v848
        %vm937 = vcmp.eq.s32.totalorder %v211, %v851
        %vm938 = vcmp.eq.s32.totalorder %v211, %v854
        %vm939 = vcmp.eq.s32.totalorder %v211, %v857
        %vm940 = vcmp.eq.s32.totalorder %v211, %v860
        %vm941 = vcmp.eq.s32.totalorder %v211, %v863
        %vm942 = vcmp.eq.s32.totalorder %v211, %v866
        %vm943 = vcmp.eq.s32.totalorder %v211, %v869
        %vm944 = vcmp.eq.s32.totalorder %v211, %v872
        %vm945 = vcmp.eq.s32.totalorder %v211, %v875
        %vm946 = vcmp.eq.s32.totalorder %v211, %v878
        %vm947 = vcmp.eq.s32.totalorder %v211, %v881
        %vm948 = vcmp.eq.s32.totalorder %v211, %v884
        %vm949 = vcmp.eq.s32.totalorder %v211, %v887
        %vm950 = vcmp.eq.s32.totalorder %v211, %v890
        %vm951 = vcmp.eq.s32.totalorder %v211, %v893
        %vm952 = vcmp.eq.s32.totalorder %v211, %v896
        %vm953 = vcmp.eq.s32.totalorder %v211, %v899
        %vm954 = vcmp.eq.s32.totalorder %v211, %v902
        %vm955 = vcmp.eq.s32.totalorder %v211, %v905
        %vm956 = vcmp.eq.s32.totalorder %v211, %v908
        %vm957 = vcmp.eq.s32.totalorder %v211, %v911
        %vm958 = vcmp.eq.s32.totalorder %v211, %v914
        %vm959 = vcmp.eq.s32.totalorder %v211, %v917
        %vm960 = vcmp.eq.s32.totalorder %v211, %v920
        %vm961 = vcmp.eq.s32.totalorder %v211, %v923
        %vm962 = vcmp.eq.s32.totalorder %v211, %v926
        %vm963 = vcmp.eq.s32.totalorder %v211, %v929
        %vm964 = vcmp.eq.s32.totalorder %v211, %v932
        %v965 = vsel %vm933, 1, 0
        %v966 = vsel %vm934, 1, 0
        %v967 = vsel %vm935, 1, 0
        %v968 = vsel %vm936, 1, 0
        %v969 = vsel %vm937, 1, 0
        %v970 = vsel %vm938, 1, 0
        %v971 = vsel %vm939, 1, 0
        %v972 = vsel %vm940, 1, 0
        %v973 = vsel %vm941, 1, 0
        %v974 = vsel %vm942, 1, 0
        %v975 = vsel %vm943, 1, 0
        %v976 = vsel %vm944, 1, 0
        %v977 = vsel %vm945, 1, 0
        %v978 = vsel %vm946, 1, 0
        %v979 = vsel %vm947, 1, 0
        %v980 = vsel %vm948, 1, 0
        %v981 = vsel %vm949, 1, 0
        %v982 = vsel %vm950, 1, 0
        %v983 = vsel %vm951, 1, 0
        %v984 = vsel %vm952, 1, 0
        %v985 = vsel %vm953, 1, 0
        %v986 = vsel %vm954, 1, 0
        %v987 = vsel %vm955, 1, 0
        %v988 = vsel %vm956, 1, 0
        %v989 = vsel %vm957, 1, 0
        %v990 = vsel %vm958, 1, 0
        %v991 = vsel %vm959, 1, 0
        %v992 = vsel %vm960, 1, 0
        %v993 = vsel %vm961, 1, 0
        %v994 = vsel %vm962, 1, 0
        %v995 = vsel %vm963, 1, 0
        %v996 = vsel %vm964, 1, 0
        %v997 = vcvt.s32.f32 %v965
        %v998 = vcvt.s32.f32 %v966
        %v999 = vcvt.s32.f32 %v967
        %v1000 = vcvt.s32.f32 %v968
        %v1001 = vcvt.s32.f32 %v969
        %v1002 = vcvt.s32.f32 %v970
        %v1003 = vcvt.s32.f32 %v971
        %v1004 = vcvt.s32.f32 %v972
        %v1005 = vcvt.s32.f32 %v973
        %v1006 = vcvt.s32.f32 %v974
        %v1007 = vcvt.s32.f32 %v975
        %v1008 = vcvt.s32.f32 %v976
        %v1009 = vcvt.s32.f32 %v977
        %v1010 = vcvt.s32.f32 %v978
        %v1011 = vcvt.s32.f32 %v979
        %v1012 = vcvt.s32.f32 %v980
        %v1013 = vcvt.s32.f32 %v981
        %v1014 = vcvt.s32.f32 %v982
        %v1015 = vcvt.s32.f32 %v983
        %v1016 = vcvt.s32.f32 %v984
        %v1017 = vcvt.s32.f32 %v985
        %v1018 = vcvt.s32.f32 %v986
        %v1019 = vcvt.s32.f32 %v987
        %v1020 = vcvt.s32.f32 %v988
        %v1021 = vcvt.s32.f32 %v989
        %v1022 = vcvt.s32.f32 %v990
        %v1023 = vcvt.s32.f32 %v991
        %v1024 = vcvt.s32.f32 %v992
        %v1025 = vcvt.s32.f32 %v993
        %v1026 = vcvt.s32.f32 %v994
        %v1027 = vcvt.s32.f32 %v995
        %v1028 = vcvt.s32.f32 %v996
        %1029 = vset.pattern.permute.xlu0 1
        %1030 = vperm.xlu0 %1029, %v244
        %v1031 = vpop.permute.xlu0 %1030
        %1032 = vset.pattern.permute.xlu0 1
        %1033 = vperm.xlu0 %1032, %v245
        %v1034 = vpop.permute.xlu0 %1033
        %1035 = vset.pattern.permute.xlu0 1
        %1036 = vperm.xlu0 %1035, %v246
        %v1037 = vpop.permute.xlu0 %1036
        %1038 = vset.pattern.permute.xlu0 1
        %1039 = vperm.xlu0 %1038, %v247
        %v1040 = vpop.permute.xlu0 %1039
        %1041 = vset.pattern.permute.xlu0 1
        %1042 = vperm.xlu0 %1041, %v248
        %v1043 = vpop.permute.xlu0 %1042
        %1044 = vset.pattern.permute.xlu0 1
        %1045 = vperm.xlu0 %1044, %v249
        %v1046 = vpop.permute.xlu0 %1045
        %1047 = vset.pattern.permute.xlu0 1
        %1048 = vperm.xlu0 %1047, %v250
        %v1049 = vpop.permute.xlu0 %1048
        %1050 = vset.pattern.permute.xlu0 1
        %1051 = vperm.xlu0 %1050, %v251
        %v1052 = vpop.permute.xlu0 %1051
        %1053 = vset.pattern.permute.xlu0 1
        %1054 = vperm.xlu0 %1053, %v252
        %v1055 = vpop.permute.xlu0 %1054
        %1056 = vset.pattern.permute.xlu0 1
        %1057 = vperm.xlu0 %1056, %v253
        %v1058 = vpop.permute.xlu0 %1057
        %1059 = vset.pattern.permute.xlu0 1
        %1060 = vperm.xlu0 %1059, %v254
        %v1061 = vpop.permute.xlu0 %1060
        %1062 = vset.pattern.permute.xlu0 1
        %1063 = vperm.xlu0 %1062, %v255
        %v1064 = vpop.permute.xlu0 %1063
        %1065 = vset.pattern.permute.xlu0 1
        %1066 = vperm.xlu0 %1065, %v256
        %v1067 = vpop.permute.xlu0 %1066
        %1068 = vset.pattern.permute.xlu0 1
        %1069 = vperm.xlu0 %1068, %v257
        %v1070 = vpop.permute.xlu0 %1069
        %1071 = vset.pattern.permute.xlu0 1
        %1072 = vperm.xlu0 %1071, %v258
        %v1073 = vpop.permute.xlu0 %1072
        %1074 = vset.pattern.permute.xlu0 1
        %1075 = vperm.xlu0 %1074, %v259
        %v1076 = vpop.permute.xlu0 %1075
        %1077 = vset.pattern.permute.xlu0 1
        %1078 = vperm.xlu0 %1077, %v260
        %v1079 = vpop.permute.xlu0 %1078
        %1080 = vset.pattern.permute.xlu0 1
        %1081 = vperm.xlu0 %1080, %v261
        %v1082 = vpop.permute.xlu0 %1081
        %1083 = vset.pattern.permute.xlu0 1
        %1084 = vperm.xlu0 %1083, %v262
        %v1085 = vpop.permute.xlu0 %1084
        %1086 = vset.pattern.permute.xlu0 1
        %1087 = vperm.xlu0 %1086, %v263
        %v1088 = vpop.permute.xlu0 %1087
        %1089 = vset.pattern.permute.xlu0 1
        %1090 = vperm.xlu0 %1089, %v264
        %v1091 = vpop.permute.xlu0 %1090
        %1092 = vset.pattern.permute.xlu0 1
        %1093 = vperm.xlu0 %1092, %v265
        %v1094 = vpop.permute.xlu0 %1093
        %1095 = vset.pattern.permute.xlu0 1
        %1096 = vperm.xlu0 %1095, %v266
        %v1097 = vpop.permute.xlu0 %1096
        %1098 = vset.pattern.permute.xlu0 1
        %1099 = vperm.xlu0 %1098, %v267
        %v1100 = vpop.permute.xlu0 %1099
        %1101 = vset.pattern.permute.xlu0 1
        %1102 = vperm.xlu0 %1101, %v268
        %v1103 = vpop.permute.xlu0 %1102
        %1104 = vset.pattern.permute.xlu0 1
        %1105 = vperm.xlu0 %1104, %v269
        %v1106 = vpop.permute.xlu0 %1105
        %1107 = vset.pattern.permute.xlu0 1
        %1108 = vperm.xlu0 %1107, %v270
        %v1109 = vpop.permute.xlu0 %1108
        %1110 = vset.pattern.permute.xlu0 1
        %1111 = vperm.xlu0 %1110, %v271
        %v1112 = vpop.permute.xlu0 %1111
        %1113 = vset.pattern.permute.xlu0 1
        %1114 = vperm.xlu0 %1113, %v272
        %v1115 = vpop.permute.xlu0 %1114
        %1116 = vset.pattern.permute.xlu0 1
        %1117 = vperm.xlu0 %1116, %v273
        %v1118 = vpop.permute.xlu0 %1117
        %1119 = vset.pattern.permute.xlu0 1
        %1120 = vperm.xlu0 %1119, %v274
        %v1121 = vpop.permute.xlu0 %1120
        %1122 = vset.pattern.permute.xlu0 1
        %1123 = vperm.xlu0 %1122, %v275
        %v1124 = vpop.permute.xlu0 %1123
        %vm1125 = vcmp.eq.s32.totalorder %v211, %v1031
        %vm1126 = vcmp.eq.s32.totalorder %v211, %v1034
        %vm1127 = vcmp.eq.s32.totalorder %v211, %v1037
        %vm1128 = vcmp.eq.s32.totalorder %v211, %v1040
        %vm1129 = vcmp.eq.s32.totalorder %v211, %v1043
        %vm1130 = vcmp.eq.s32.totalorder %v211, %v1046
        %vm1131 = vcmp.eq.s32.totalorder %v211, %v1049
        %vm1132 = vcmp.eq.s32.totalorder %v211, %v1052
        %vm1133 = vcmp.eq.s32.totalorder %v211, %v1055
        %vm1134 = vcmp.eq.s32.totalorder %v211, %v1058
        %vm1135 = vcmp.eq.s32.totalorder %v211, %v1061
        %vm1136 = vcmp.eq.s32.totalorder %v211, %v1064
        %vm1137 = vcmp.eq.s32.totalorder %v211, %v1067
        %vm1138 = vcmp.eq.s32.totalorder %v211, %v1070
        %vm1139 = vcmp.eq.s32.totalorder %v211, %v1073
        %vm1140 = vcmp.eq.s32.totalorder %v211, %v1076
        %vm1141 = vcmp.eq.s32.totalorder %v211, %v1079
        %vm1142 = vcmp.eq.s32.totalorder %v211, %v1082
        %vm1143 = vcmp.eq.s32.totalorder %v211, %v1085
        %vm1144 = vcmp.eq.s32.totalorder %v211, %v1088
        %vm1145 = vcmp.eq.s32.totalorder %v211, %v1091
        %vm1146 = vcmp.eq.s32.totalorder %v211, %v1094
        %vm1147 = vcmp.eq.s32.totalorder %v211, %v1097
        %vm1148 = vcmp.eq.s32.totalorder %v211, %v1100
        %vm1149 = vcmp.eq.s32.totalorder %v211, %v1103
        %vm1150 = vcmp.eq.s32.totalorder %v211, %v1106
        %vm1151 = vcmp.eq.s32.totalorder %v211, %v1109
        %vm1152 = vcmp.eq.s32.totalorder %v211, %v1112
        %vm1153 = vcmp.eq.s32.totalorder %v211, %v1115
        %vm1154 = vcmp.eq.s32.totalorder %v211, %v1118
        %vm1155 = vcmp.eq.s32.totalorder %v211, %v1121
        %vm1156 = vcmp.eq.s32.totalorder %v211, %v1124
        %v1157 = vsel %vm1125, 1, 0
        %v1158 = vsel %vm1126, 1, 0
        %v1159 = vsel %vm1127, 1, 0
        %v1160 = vsel %vm1128, 1, 0
        %v1161 = vsel %vm1129, 1, 0
        %v1162 = vsel %vm1130, 1, 0
        %v1163 = vsel %vm1131, 1, 0
        %v1164 = vsel %vm1132, 1, 0
        %v1165 = vsel %vm1133, 1, 0
        %v1166 = vsel %vm1134, 1, 0
        %v1167 = vsel %vm1135, 1, 0
        %v1168 = vsel %vm1136, 1, 0
        %v1169 = vsel %vm1137, 1, 0
        %v1170 = vsel %vm1138, 1, 0
        %v1171 = vsel %vm1139, 1, 0
        %v1172 = vsel %vm1140, 1, 0
        %v1173 = vsel %vm1141, 1, 0
        %v1174 = vsel %vm1142, 1, 0
        %v1175 = vsel %vm1143, 1, 0
        %v1176 = vsel %vm1144, 1, 0
        %v1177 = vsel %vm1145, 1, 0
        %v1178 = vsel %vm1146, 1, 0
        %v1179 = vsel %vm1147, 1, 0
        %v1180 = vsel %vm1148, 1, 0
        %v1181 = vsel %vm1149, 1, 0
        %v1182 = vsel %vm1150, 1, 0
        %v1183 = vsel %vm1151, 1, 0
        %v1184 = vsel %vm1152, 1, 0
        %v1185 = vsel %vm1153, 1, 0
        %v1186 = vsel %vm1154, 1, 0
        %v1187 = vsel %vm1155, 1, 0
        %v1188 = vsel %vm1156, 1, 0
        %v1189 = vcvt.s32.f32 %v1157
        %v1190 = vcvt.s32.f32 %v1158
        %v1191 = vcvt.s32.f32 %v1159
        %v1192 = vcvt.s32.f32 %v1160
        %v1193 = vcvt.s32.f32 %v1161
        %v1194 = vcvt.s32.f32 %v1162
        %v1195 = vcvt.s32.f32 %v1163
        %v1196 = vcvt.s32.f32 %v1164
        %v1197 = vcvt.s32.f32 %v1165
        %v1198 = vcvt.s32.f32 %v1166
        %v1199 = vcvt.s32.f32 %v1167
        %v1200 = vcvt.s32.f32 %v1168
        %v1201 = vcvt.s32.f32 %v1169
        %v1202 = vcvt.s32.f32 %v1170
        %v1203 = vcvt.s32.f32 %v1171
        %v1204 = vcvt.s32.f32 %v1172
        %v1205 = vcvt.s32.f32 %v1173
        %v1206 = vcvt.s32.f32 %v1174
        %v1207 = vcvt.s32.f32 %v1175
        %v1208 = vcvt.s32.f32 %v1176
        %v1209 = vcvt.s32.f32 %v1177
        %v1210 = vcvt.s32.f32 %v1178
        %v1211 = vcvt.s32.f32 %v1179
        %v1212 = vcvt.s32.f32 %v1180
        %v1213 = vcvt.s32.f32 %v1181
        %v1214 = vcvt.s32.f32 %v1182
        %v1215 = vcvt.s32.f32 %v1183
        %v1216 = vcvt.s32.f32 %v1184
        %v1217 = vcvt.s32.f32 %v1185
        %v1218 = vcvt.s32.f32 %v1186
        %v1219 = vcvt.s32.f32 %v1187
        %v1220 = vcvt.s32.f32 %v1188
        %v1221 = vadd.f32 %v997, %v1189
        %v1222 = vadd.f32 %v998, %v1190
        %v1223 = vadd.f32 %v999, %v1191
        %v1224 = vadd.f32 %v1000, %v1192
        %v1225 = vadd.f32 %v1001, %v1193
        %v1226 = vadd.f32 %v1002, %v1194
        %v1227 = vadd.f32 %v1003, %v1195
        %v1228 = vadd.f32 %v1004, %v1196
        %v1229 = vadd.f32 %v1005, %v1197
        %v1230 = vadd.f32 %v1006, %v1198
        %v1231 = vadd.f32 %v1007, %v1199
        %v1232 = vadd.f32 %v1008, %v1200
        %v1233 = vadd.f32 %v1009, %v1201
        %v1234 = vadd.f32 %v1010, %v1202
        %v1235 = vadd.f32 %v1011, %v1203
        %v1236 = vadd.f32 %v1012, %v1204
        %v1237 = vadd.f32 %v1013, %v1205
        %v1238 = vadd.f32 %v1014, %v1206
        %v1239 = vadd.f32 %v1015, %v1207
        %v1240 = vadd.f32 %v1016, %v1208
        %v1241 = vadd.f32 %v1017, %v1209
        %v1242 = vadd.f32 %v1018, %v1210
        %v1243 = vadd.f32 %v1019, %v1211
        %v1244 = vadd.f32 %v1020, %v1212
        %v1245 = vadd.f32 %v1021, %v1213
        %v1246 = vadd.f32 %v1022, %v1214
        %v1247 = vadd.f32 %v1023, %v1215
        %v1248 = vadd.f32 %v1024, %v1216
        %v1249 = vadd.f32 %v1025, %v1217
        %v1250 = vadd.f32 %v1026, %v1218
        %v1251 = vadd.f32 %v1027, %v1219
        %v1252 = vadd.f32 %v1028, %v1220
        %1253 = vmatpush.msra.mxu0 %v209
        %1254 = vmatpush.msra.mxu0 %v208
        %1255 = vmatpush.msra.mxu0 %v207
        %1256 = vmatpush.msra.mxu0 %v206
        %1257 = vmatpush.msra.mxu0 %v205
        %1258 = vmatpush.msra.mxu0 %v204
        %1259 = vmatpush.msra.mxu0 %v203
        %1260 = vmatpush.msra.mxu0 %v202
        %1261 = vmatpush.msra.mxu0 %v201
        %1262 = vmatpush.msra.mxu0 %v200
        %1263 = vmatpush.msra.mxu0 %v199
        %1264 = vmatpush.msra.mxu0 %v198
        %1265 = vmatpush.msra.mxu0 %v197
        %1266 = vmatpush.msra.mxu0 %v196
        %1267 = vmatpush.msra.mxu0 %v195
        %1268 = vmatpush.msra.mxu0 %v194
        %1269 = vmatmul.f32.gmra.mxu0 %v1221
        %v1270 = vpop.f32.mrf.mxu0
        %v1271 = vadd.f32 0.0, %v1270
        %1272 = vmatmul.f32.gmra.mxu0 %v1222
        %v1273 = vpop.f32.mrf.mxu0
        %v1274 = vadd.f32 0.0, %v1273
        %1275 = vmatmul.f32.gmra.mxu0 %v1223
        %v1276 = vpop.f32.mrf.mxu0
        %v1277 = vadd.f32 0.0, %v1276
        %1278 = vmatmul.f32.gmra.mxu0 %v1224
        %v1279 = vpop.f32.mrf.mxu0
        %v1280 = vadd.f32 0.0, %v1279
        %1281 = vmatmul.f32.gmra.mxu0 %v1225
        %v1282 = vpop.f32.mrf.mxu0
        %v1283 = vadd.f32 0.0, %v1282
        %1284 = vmatmul.f32.gmra.mxu0 %v1226
        %v1285 = vpop.f32.mrf.mxu0
        %v1286 = vadd.f32 0.0, %v1285
        %1287 = vmatmul.f32.gmra.mxu0 %v1227
        %v1288 = vpop.f32.mrf.mxu0
        %v1289 = vadd.f32 0.0, %v1288
        %1290 = vmatmul.f32.gmra.mxu0 %v1228
        %v1291 = vpop.f32.mrf.mxu0
        %v1292 = vadd.f32 0.0, %v1291
        %1293 = vmatmul.f32.gmra.mxu0 %v1229
        %v1294 = vpop.f32.mrf.mxu0
        %v1295 = vadd.f32 0.0, %v1294
        %1296 = vmatmul.f32.gmra.mxu0 %v1230
        %v1297 = vpop.f32.mrf.mxu0
        %v1298 = vadd.f32 0.0, %v1297
        %1299 = vmatmul.f32.gmra.mxu0 %v1231
        %v1300 = vpop.f32.mrf.mxu0
        %v1301 = vadd.f32 0.0, %v1300
        %1302 = vmatmul.f32.gmra.mxu0 %v1232
        %v1303 = vpop.f32.mrf.mxu0
        %v1304 = vadd.f32 0.0, %v1303
        %1305 = vmatmul.f32.gmra.mxu0 %v1233
        %v1306 = vpop.f32.mrf.mxu0
        %v1307 = vadd.f32 0.0, %v1306
        %1308 = vmatmul.f32.gmra.mxu0 %v1234
        %v1309 = vpop.f32.mrf.mxu0
        %v1310 = vadd.f32 0.0, %v1309
        %1311 = vmatmul.f32.gmra.mxu0 %v1235
        %v1312 = vpop.f32.mrf.mxu0
        %v1313 = vadd.f32 0.0, %v1312
        %1314 = vmatmul.f32.gmra.mxu0 %v1236
        %v1315 = vpop.f32.mrf.mxu0
        %v1316 = vadd.f32 0.0, %v1315
        %1317 = vmatmul.f32.gmra.mxu0 %v1237
        %v1318 = vpop.f32.mrf.mxu0
        %v1319 = vadd.f32 0.0, %v1318
        %1320 = vmatmul.f32.gmra.mxu0 %v1238
        %v1321 = vpop.f32.mrf.mxu0
        %v1322 = vadd.f32 0.0, %v1321
        %1323 = vmatmul.f32.gmra.mxu0 %v1239
        %v1324 = vpop.f32.mrf.mxu0
        %v1325 = vadd.f32 0.0, %v1324
        %1326 = vmatmul.f32.gmra.mxu0 %v1240
        %v1327 = vpop.f32.mrf.mxu0
        %v1328 = vadd.f32 0.0, %v1327
        %1329 = vmatmul.f32.gmra.mxu0 %v1241
        %v1330 = vpop.f32.mrf.mxu0
        %v1331 = vadd.f32 0.0, %v1330
        %1332 = vmatmul.f32.gmra.mxu0 %v1242
        %v1333 = vpop.f32.mrf.mxu0
        %v1334 = vadd.f32 0.0, %v1333
        %1335 = vmatmul.f32.gmra.mxu0 %v1243
        %v1336 = vpop.f32.mrf.mxu0
        %v1337 = vadd.f32 0.0, %v1336
        %1338 = vmatmul.f32.gmra.mxu0 %v1244
        %v1339 = vpop.f32.mrf.mxu0
        %v1340 = vadd.f32 0.0, %v1339
        %1341 = vmatmul.f32.gmra.mxu0 %v1245
        %v1342 = vpop.f32.mrf.mxu0
        %v1343 = vadd.f32 0.0, %v1342
        %1344 = vmatmul.f32.gmra.mxu0 %v1246
        %v1345 = vpop.f32.mrf.mxu0
        %v1346 = vadd.f32 0.0, %v1345
        %1347 = vmatmul.f32.gmra.mxu0 %v1247
        %v1348 = vpop.f32.mrf.mxu0
        %v1349 = vadd.f32 0.0, %v1348
        %1350 = vmatmul.f32.gmra.mxu0 %v1248
        %v1351 = vpop.f32.mrf.mxu0
        %v1352 = vadd.f32 0.0, %v1351
        %1353 = vmatmul.f32.gmra.mxu0 %v1249
        %v1354 = vpop.f32.mrf.mxu0
        %v1355 = vadd.f32 0.0, %v1354
        %1356 = vmatmul.f32.gmra.mxu0 %v1250
        %v1357 = vpop.f32.mrf.mxu0
        %v1358 = vadd.f32 0.0, %v1357
        %1359 = vmatmul.f32.gmra.mxu0 %v1251
        %v1360 = vpop.f32.mrf.mxu0
        %v1361 = vadd.f32 0.0, %v1360
        %1362 = vmatmul.f32.gmra.mxu0 %v1252
        %v1363 = vpop.f32.mrf.mxu0
        %v1364 = vadd.f32 0.0, %v1363
        %1365 = vdwg.mxu0
        %v1366 = vmax.f32 %v1271, 0.0
        %v1367 = vmax.f32 %v1274, 0.0
        %v1368 = vmax.f32 %v1277, 0.0
        %v1369 = vmax.f32 %v1280, 0.0
        %v1370 = vmax.f32 %v1283, 0.0
        %v1371 = vmax.f32 %v1286, 0.0
        %v1372 = vmax.f32 %v1289, 0.0
        %v1373 = vmax.f32 %v1292, 0.0
        %v1374 = vmax.f32 %v1295, 0.0
        %v1375 = vmax.f32 %v1298, 0.0
        %v1376 = vmax.f32 %v1301, 0.0
        %v1377 = vmax.f32 %v1304, 0.0
        %v1378 = vmax.f32 %v1307, 0.0
        %v1379 = vmax.f32 %v1310, 0.0
        %v1380 = vmax.f32 %v1313, 0.0
        %v1381 = vmax.f32 %v1316, 0.0
        %v1382 = vmax.f32 %v1319, 0.0
        %v1383 = vmax.f32 %v1322, 0.0
        %v1384 = vmax.f32 %v1325, 0.0
        %v1385 = vmax.f32 %v1328, 0.0
        %v1386 = vmax.f32 %v1331, 0.0
        %v1387 = vmax.f32 %v1334, 0.0
        %v1388 = vmax.f32 %v1337, 0.0
        %v1389 = vmax.f32 %v1340, 0.0
        %v1390 = vmax.f32 %v1343, 0.0
        %v1391 = vmax.f32 %v1346, 0.0
        %v1392 = vmax.f32 %v1349, 0.0
        %v1393 = vmax.f32 %v1352, 0.0
        %v1394 = vmax.f32 %v1355, 0.0
        %v1395 = vmax.f32 %v1358, 0.0
        %v1396 = vmax.f32 %v1361, 0.0
        %v1397 = vmax.f32 %v1364, 0.0
        %1430 = vrot.lane.b32.xlu0 %v1366, 64
        %v1431 = vpop.permute.xlu0 %1430
        %1432 = vrot.lane.b32.xlu0 %v1367, 64
        %v1433 = vpop.permute.xlu0 %1432
        %1434 = vrot.lane.b32.xlu0 %v1368, 64
        %v1435 = vpop.permute.xlu0 %1434
        %1436 = vrot.lane.b32.xlu0 %v1369, 64
        %v1437 = vpop.permute.xlu0 %1436
        %1438 = vrot.lane.b32.xlu0 %v1370, 64
        %v1439 = vpop.permute.xlu0 %1438
        %1440 = vrot.lane.b32.xlu0 %v1371, 64
        %v1441 = vpop.permute.xlu0 %1440
        %1442 = vrot.lane.b32.xlu0 %v1372, 64
        %v1443 = vpop.permute.xlu0 %1442
        %1444 = vrot.lane.b32.xlu0 %v1373, 64
        %v1445 = vpop.permute.xlu0 %1444
        %1446 = vrot.lane.b32.xlu0 %v1374, 64
        %v1447 = vpop.permute.xlu0 %1446
        %1448 = vrot.lane.b32.xlu0 %v1375, 64
        %v1449 = vpop.permute.xlu0 %1448
        %1450 = vrot.lane.b32.xlu0 %v1376, 64
        %v1451 = vpop.permute.xlu0 %1450
        %1452 = vrot.lane.b32.xlu0 %v1377, 64
        %v1453 = vpop.permute.xlu0 %1452
        %1454 = vrot.lane.b32.xlu0 %v1378, 64
        %v1455 = vpop.permute.xlu0 %1454
        %1456 = vrot.lane.b32.xlu0 %v1379, 64
        %v1457 = vpop.permute.xlu0 %1456
        %1458 = vrot.lane.b32.xlu0 %v1380, 64
        %v1459 = vpop.permute.xlu0 %1458
        %1460 = vrot.lane.b32.xlu0 %v1381, 64
        %v1461 = vpop.permute.xlu0 %1460
        %1462 = vrot.lane.b32.xlu0 %v1382, 64
        %v1463 = vpop.permute.xlu0 %1462
        %1464 = vrot.lane.b32.xlu0 %v1383, 64
        %v1465 = vpop.permute.xlu0 %1464
        %1466 = vrot.lane.b32.xlu0 %v1384, 64
        %v1467 = vpop.permute.xlu0 %1466
        %1468 = vrot.lane.b32.xlu0 %v1385, 64
        %v1469 = vpop.permute.xlu0 %1468
        %1470 = vrot.lane.b32.xlu0 %v1386, 64
        %v1471 = vpop.permute.xlu0 %1470
        %1472 = vrot.lane.b32.xlu0 %v1387, 64
        %v1473 = vpop.permute.xlu0 %1472
        %1474 = vrot.lane.b32.xlu0 %v1388, 64
        %v1475 = vpop.permute.xlu0 %1474
        %1476 = vrot.lane.b32.xlu0 %v1389, 64
        %v1477 = vpop.permute.xlu0 %1476
        %1478 = vrot.lane.b32.xlu0 %v1390, 64
        %v1479 = vpop.permute.xlu0 %1478
        %1480 = vrot.lane.b32.xlu0 %v1391, 64
        %v1481 = vpop.permute.xlu0 %1480
        %1482 = vrot.lane.b32.xlu0 %v1392, 64
        %v1483 = vpop.permute.xlu0 %1482
        %1484 = vrot.lane.b32.xlu0 %v1393, 64
        %v1485 = vpop.permute.xlu0 %1484
        %1486 = vrot.lane.b32.xlu0 %v1394, 64
        %v1487 = vpop.permute.xlu0 %1486
        %1488 = vrot.lane.b32.xlu0 %v1395, 64
        %v1489 = vpop.permute.xlu0 %1488
        %1490 = vrot.lane.b32.xlu0 %v1396, 64
        %v1491 = vpop.permute.xlu0 %1490
        %1492 = vrot.lane.b32.xlu0 %v1397, 64
        %v1493 = vpop.permute.xlu0 %1492
        %vm1526 = vcmask 523264
        %v1527 = vsel %vm1526, %v805, %v1431
        %v1528 = vsel %vm1526, %v806, %v1433
        %v1529 = vsel %vm1526, %v807, %v1435
        %v1530 = vsel %vm1526, %v808, %v1437
        %v1531 = vsel %vm1526, %v809, %v1439
        %v1532 = vsel %vm1526, %v810, %v1441
        %v1533 = vsel %vm1526, %v811, %v1443
        %v1534 = vsel %vm1526, %v812, %v1445
        %v1535 = vsel %vm1526, %v813, %v1447
        %v1536 = vsel %vm1526, %v814, %v1449
        %v1537 = vsel %vm1526, %v815, %v1451
        %v1538 = vsel %vm1526, %v816, %v1453
        %v1539 = vsel %vm1526, %v817, %v1455
        %v1540 = vsel %vm1526, %v818, %v1457
        %v1541 = vsel %vm1526, %v819, %v1459
        %v1542 = vsel %vm1526, %v820, %v1461
        %v1543 = vsel %vm1526, %v821, %v1463
        %v1544 = vsel %vm1526, %v822, %v1465
        %v1545 = vsel %vm1526, %v823, %v1467
        %v1546 = vsel %vm1526, %v824, %v1469
        %v1547 = vsel %vm1526, %v825, %v1471
        %v1548 = vsel %vm1526, %v826, %v1473
        %v1549 = vsel %vm1526, %v827, %v1475
        %v1550 = vsel %vm1526, %v828, %v1477
        %v1551 = vsel %vm1526, %v829, %v1479
        %v1552 = vsel %vm1526, %v830, %v1481
        %v1553 = vsel %vm1526, %v831, %v1483
        %v1554 = vsel %vm1526, %v832, %v1485
        %v1555 = vsel %vm1526, %v833, %v1487
        %v1556 = vsel %vm1526, %v834, %v1489
        %v1557 = vsel %vm1526, %v835, %v1491
        %v1558 = vsel %vm1526, %v836, %v1493
        %1559 = vst [vmem:[%s180] sm:$0xff] %v1527
        %1560 = vst [vmem:[%s180 + $0x8] sm:$0xff] %v1528
        %1561 = vst [vmem:[%s180 + $0x10] sm:$0xff] %v1529
        %1562 = vst [vmem:[%s180 + $0x18] sm:$0xff] %v1530
        %1563 = vst [vmem:[%s180 + $0x20] sm:$0xff] %v1531
        %1564 = vst [vmem:[%s180 + $0x28] sm:$0xff] %v1532
        %1565 = vst [vmem:[%s180 + $0x30] sm:$0xff] %v1533
        %1566 = vst [vmem:[%s180 + $0x38] sm:$0xff] %v1534
        %1567 = vst [vmem:[%s180 + $0x40] sm:$0xff] %v1535
        %1568 = vst [vmem:[%s180 + $0x48] sm:$0xff] %v1536
        %1569 = vst [vmem:[%s180 + $0x50] sm:$0xff] %v1537
        %1570 = vst [vmem:[%s180 + $0x58] sm:$0xff] %v1538
        %1571 = vst [vmem:[%s180 + $0x60] sm:$0xff] %v1539
        %1572 = vst [vmem:[%s180 + $0x68] sm:$0xff] %v1540
        %1573 = vst [vmem:[%s180 + $0x70] sm:$0xff] %v1541
        %1574 = vst [vmem:[%s180 + $0x78] sm:$0xff] %v1542
        %1575 = vst [vmem:[%s180 + $0x80] sm:$0xff] %v1543
        %1576 = vst [vmem:[%s180 + $0x88] sm:$0xff] %v1544
        %1577 = vst [vmem:[%s180 + $0x90] sm:$0xff] %v1545
        %1578 = vst [vmem:[%s180 + $0x98] sm:$0xff] %v1546
        %1579 = vst [vmem:[%s180 + $0xa0] sm:$0xff] %v1547
        %1580 = vst [vmem:[%s180 + $0xa8] sm:$0xff] %v1548
        %1581 = vst [vmem:[%s180 + $0xb0] sm:$0xff] %v1549
        %1582 = vst [vmem:[%s180 + $0xb8] sm:$0xff] %v1550
        %1583 = vst [vmem:[%s180 + $0xc0] sm:$0xff] %v1551
        %1584 = vst [vmem:[%s180 + $0xc8] sm:$0xff] %v1552
        %1585 = vst [vmem:[%s180 + $0xd0] sm:$0xff] %v1553
        %1586 = vst [vmem:[%s180 + $0xd8] sm:$0xff] %v1554
        %1587 = vst [vmem:[%s180 + $0xe0] sm:$0xff] %v1555
        %1588 = vst [vmem:[%s180 + $0xe8] sm:$0xff] %v1556
        %1589 = vst [vmem:[%s180 + $0xf0] sm:$0xff] %v1557
        %1590 = vst [vmem:[%s180 + $0xf8] sm:$0xff] %v1558
        %s1591 = sand.u32 %s98, 1
        %s1592 = scalar_lea.sflag [#allocation3], %s1591
        %s1593 = sand.u32 %s98, 1
        %s1594 = smul.addr %s1593, 256
        %s1595 = scalar_lea.vmem [#allocation2], %s1594
        // Predicated region
        $region33: #{tpu_custom_call.1} parent=31 // pred_check
          %p1596 = pneg %p108
        $region34: #{tpu_custom_call.1} parent=31 // pred_check_branch
          %1598 = sbr.rel (%p1596) target = $region36
        $region35: #{tpu_custom_call.1} parent=31 // pred_region
          %s1599 = smul.u32 32, %s17
          %1601 = vsyncadd %s1592, 0
          %s1602 = smul.addr %s1599, 8
          %s1603 = scalar_lea.hbm %s3, %s1602
          %s1604 = sshll.u32 %s1595, 4
          %s1605 = int_to_ptr.vmem [resolvable:$true] %s1604
          %s1606 = sshll.u32 %s1603, 4
          %s1607 = int_to_ptr.hbm [resolvable:$true] %s1606
          %1612 = dma.vmem_to_hbm [thread:$0]  %s1605, 4096, %s1607, %s1592, 128, 128, 8
        $region36: #{tpu_custom_call.1} parent=31 // pred_fallthru
          _
      $region32: #{tpu_custom_call.1} parent=5 // pred_fallthru
        _
      %p1613 = scmp.le.s32.totalorder 2, %s12
      // Predicated region
      $region37: #{tpu_custom_call.1} parent=5 // pred_check
        %p1614 = pneg %p1613
      $region38: #{tpu_custom_call.1} parent=5 // pred_check_branch
        %1616 = sbr.rel (%p1614) target = $region40
      $region39: #{tpu_custom_call.1} parent=5 // pred_region
        %s1617 = ssub.s32 %s12, 2
        // Predicated region
        $region41: #{tpu_custom_call.1} parent=39 // pred_check
          %p1618 = pneg %p114
        $region42: #{tpu_custom_call.1} parent=39 // pred_check_branch
          %1620 = sbr.rel (%p1618) target = $region44
        $region43: #{tpu_custom_call.1} parent=39 // pred_region
          %s1621 = sand.u32 %s99, 1
          %s1622 = scalar_lea.sflag [#allocation3], %s1621
          %s1623 = sand.u32 %s99, 1
          %s1624 = smul.addr %s1623, 256
          %s1625 = scalar_lea.vmem [#allocation2], %s1624
          %1627 = dma.done %s1622, 4096
        $region44: #{tpu_custom_call.1} parent=39 // pred_fallthru
          _
      $region40: #{tpu_custom_call.1} parent=5 // pred_fallthru
        _
    $region6: #{tpu_custom_call.1} parent=1 // loop_footer
      %s16 = sadd.s32 1, %s12
    $region7: #{tpu_custom_call.1} parent=1 // loop_footer_branch
      %11 = sbr.rel target = $region3
    $region8: #{tpu_custom_call.1} parent=1 // loop_exit
      _
    %1628 = vsyncpa [#allocation3], 1
    %s1629 = scalar_lea.sflag [#allocation3], 1
    %1630 = vsyncpa %s1629, 1

</llo_original>
